<compile_context>
chip_gen: v7x
topology: tpu7x:2x2x1
jax: 0.10.0
libtpu: 0.0.40
codegen_flags: <defaults>
</compile_context>

<pallas_src>
import functools

import jax
import jax.numpy as jnp
from jax.experimental import pallas as pl
from jax.experimental.pallas import tpu as pltpu

F32 = jnp.float32
BF16 = jnp.bfloat16


def _round_up(x, m):
    return (x + m - 1) // m * m


def _vmem_capacity():
    try:
        return int(pltpu.get_tpu_info().vmem_capacity_bytes)
    except Exception:
        return 64 * 1024 * 1024  # conservative (v7x-sized) fallback


def _block_vmem_bytes(th, w, cin_p, sq_p, eout_p):
    """Rough per-step VMEM footprint (pipeline buffers double-counted)."""
    xa = th * w * cin_p * 2                 # main input block (bf16)
    xb = 2 * w * cin_p * 2                  # 2-row halo block (bf16)
    out = th * w * eout_p * 2               # output block (bf16)
    s_loc = (th + 2) * (w + 2) * sq_p * 2   # squeeze activation scratch
    im = th * w * 9 * sq_p * 2              # im2col scratch
    y32 = th * w * eout_p * 4               # f32 accumulator value
    s32 = (th + 2) * w * sq_p * 4           # f32 squeeze value
    wts = (cin_p * sq_p + 9 * sq_p * eout_p) * 2 + 4 * (sq_p + eout_p) * 4
    return 2 * (xa + xb + out) + s_loc + im + y32 + s32 + wts


def _pick_th(h, w, cin_p, sq_p, eout_p):
    """Largest TH in {8,4,2} dividing H whose footprint fits ~half of VMEM."""
    budget = _vmem_capacity() // 2
    for th in (8, 4, 2):
        if h % th == 0 and _block_vmem_bytes(th, w, cin_p, sq_p, eout_p) <= budget:
            return th
    for th in (2, 4, 8):
        if h % th == 0:
            return th
    # TODO(synk): odd H would need a ragged last row-block (masked output rows).
    raise ValueError(f"H={h} needs an even divisor in {{2,4,8}}")


# ----------------------------------------------------------------------------
# Fused Fire kernel: squeeze + (expand1x1 folded into 3x3) + BN-affine + ReLU
# ----------------------------------------------------------------------------

def _fire_kernel(xa_ref, xb_ref,
                 wsq_ref, sqs_ref, sqb_ref,
                 wex_ref, exs_ref, exb_ref,
                 o_ref, s_loc, im_loc,
                 *, th, w, h, cin_p, sq_p, eout_p):
    hb = pl.program_id(1)

    # ---- squeeze 1x1 conv + folded-BN affine + ReLU on the TH+2 halo rows ----
    xa = xa_ref[...].reshape(th * w, cin_p)            # main TH rows
    xb = xb_ref[...].reshape(2 * w, cin_p)             # 2 bottom-halo rows
    x_all = jnp.concatenate([xa, xb], axis=0)          # ((TH+2)*W, Cin_p) bf16
    s = jnp.dot(x_all, wsq_ref[...], preferred_element_type=jnp.float32)
    s = jnp.maximum(s * sqs_ref[...] + sqb_ref[...], 0.0)
    s = s.reshape(th + 2, w, sq_p)

    # The 3x3 conv pads the *squeeze activation* with zeros; squeeze(0) != 0,
    # so force the out-of-image halo rows to zero.
    row = hb * th + jax.lax.broadcasted_iota(jnp.int32, (th + 2, 1, 1), 0)
    s = jnp.where((row >= 1) & (row <= h), s, 0.0)

    # Stage into the column-padded VMEM scratch (left/right borders = zero).
    zcol = jnp.zeros((th + 2, 1, sq_p), BF16)
    s_loc[:, 0:1, :] = zcol
    s_loc[:, w + 1:w + 2, :] = zcol
    s_loc[:, 1:w + 1, :] = s.astype(BF16)

    # ---- expand: 9-tap im2col (K = 9*Sq_p) + ONE MXU matmul per block --------
    # Shifts are applied to the bf16 squeeze activation (not f32 MXU results).
    t = 0
    for dh in range(3):
        for dw in range(3):
            tap = s_loc[dh:dh + th, dw:dw + w, :]              # (TH, W, Sq) bf16
            im_loc[:, t * sq_p:(t + 1) * sq_p] = tap.reshape(th * w, sq_p)
            t += 1

    y = jnp.dot(im_loc[...], wex_ref[...], preferred_element_type=jnp.float32)
    y = jnp.maximum(y * exs_ref[...] + exb_ref[...], 0.0)      # fused BN + ReLU
    o_ref[...] = y.reshape(th, w, eout_p).astype(o_ref.dtype)  # lane-dense store


def fire_forward_nhwc(x, p, *, eout, out_dtype=BF16):
    """x: (N, H, W, Cin) float; p: prepared (padded/packed) params.

    Returns (N, H, W, eout) with channels ordered [expand1x1 | expand3x3]
    (== torch.cat of the PyTorch module).
    """
    n, h, w, cin = x.shape
    cin_p, sq_p = p["w_sq"].shape
    eout_p = p["w_ex"].shape[1]

    assert w % 16 == 0, "W must be a multiple of 16 (bf16 sublane tile)"
    th = _pick_th(h, w, cin_p, sq_p, eout_p)
    hb_n = h // th

    xb = x.astype(BF16)
    if cin_p != cin:
        xb = jnp.pad(xb, ((0, 0), (0, 0), (0, 0), (0, cin_p - cin)))
    x_pad = jnp.pad(xb, ((0, 0), (1, 1), (0, 0), (0, 0)))   # (N, H+2, W, Cin_p)

    blk = _block_vmem_bytes(th, w, cin_p, sq_p, eout_p)
    vmem_need = int(blk * 1.4) + (2 << 20)
    vmem_limit = None
    if vmem_need > (32 << 20):   # only raise above the default when needed
        vmem_limit = min(vmem_need, _vmem_capacity() * 9 // 10)

    flops = 2 * n * hb_n * ((th + 2) * w * cin_p * sq_p
                            + th * w * 9 * sq_p * eout_p)
    bytes_accessed = (n * (h + 2 * hb_n) * w * cin_p * 2
                      + n * h * w * eout_p * 2
                      + (cin_p * sq_p + 9 * sq_p * eout_p) * 2)

    kernel = functools.partial(_fire_kernel, th=th, w=w, h=h,
                               cin_p=cin_p, sq_p=sq_p, eout_p=eout_p)

    out = pl.pallas_call(
        kernel,
        out_shape=jax.ShapeDtypeStruct((n, h, w, eout_p), out_dtype),
        grid=(n, hb_n),
        in_specs=[
            # main TH rows of the spatially padded input (block hb)
            pl.BlockSpec((None, th, w, cin_p), lambda ni, hb: (ni, hb, 0, 0)),
            # 2-row bottom halo: a second view of the SAME array, so each row is
            # read ~(TH+2)/TH times instead of 3x, and it auto-pipelines.
            pl.BlockSpec((None, 2, w, cin_p),
                         lambda ni, hb: (ni, (hb + 1) * (th // 2), 0, 0)),
            pl.BlockSpec((cin_p, sq_p), lambda ni, hb: (0, 0)),
            pl.BlockSpec((1, sq_p), lambda ni, hb: (0, 0)),
            pl.BlockSpec((1, sq_p), lambda ni, hb: (0, 0)),
            pl.BlockSpec((9 * sq_p, eout_p), lambda ni, hb: (0, 0)),
            pl.BlockSpec((1, eout_p), lambda ni, hb: (0, 0)),
            pl.BlockSpec((1, eout_p), lambda ni, hb: (0, 0)),
        ],
        out_specs=pl.BlockSpec((None, th, w, eout_p),
                               lambda ni, hb: (ni, hb, 0, 0)),
        scratch_shapes=[
            pltpu.VMEM((th + 2, w + 2, sq_p), BF16),        # squeeze activation
            pltpu.VMEM((th * w, 9 * sq_p), BF16),           # im2col (K-packed)
        ],
        compiler_params=pltpu.CompilerParams(
            dimension_semantics=("parallel", "parallel"),
            vmem_limit_bytes=vmem_limit),
        cost_estimate=pl.CostEstimate(flops=flops, transcendentals=0,
                                      bytes_accessed=bytes_accessed),
    )(x_pad, x_pad,
      p["w_sq"], p["sq_scale"], p["sq_bias"],
      p["w_ex"], p["ex_scale"], p["ex_bias"])

    if eout != eout_p:
        # only when e1+e3 is not a 128 multiple (never for the 64+64 block)
        out = out[..., :eout]
    return out


def fire_forward(x_nchw, p, *, eout, out_dtype=BF16):
    """NCHW wrapper matching the PyTorch interface.  When chaining Fire blocks,
    call fire_forward_nhwc directly and stay NHWC (saves two HBM round trips)."""
    x = jnp.transpose(x_nchw, (0, 2, 3, 1))
    y = fire_forward_nhwc(x, p, eout=eout, out_dtype=out_dtype)
    return jnp.transpose(y, (0, 3, 1, 2))


# ----------------------------------------------------------------------------
# Deterministic synthetic parameters (conv + folded BatchNorm)
# ----------------------------------------------------------------------------

class KeyGen:
    def __init__(self, key):
        self.key = key

    def __call__(self):
        self.key, k = jax.random.split(self.key)
        return k


def init_fire_params(key, inplanes, squeeze_planes, expand1x1_planes, expand3x3_planes):
    """Raw f32 parameters with BatchNorm folded into a per-channel affine."""
    kg = KeyGen(key)

    # TODO(synk): BatchNorm is folded in inference-mode (running-stats)
    # semantics; training-mode batch statistics are not reproduced.
    def conv(cin, cout, taps):
        fan_in = taps * cin
        w = jax.random.normal(kg(), (taps, cin, cout), F32) / jnp.sqrt(float(fan_in))
        b = 0.01 * jax.random.normal(kg(), (cout,), F32)
        gamma = 1.0 + 0.1 * jax.random.normal(kg(), (cout,), F32)
        beta = 0.02 * jax.random.normal(kg(), (cout,), F32)
        mean = 0.02 * jax.random.normal(kg(), (cout,), F32)
        var = jax.random.uniform(kg(), (cout,), F32, minval=0.5, maxval=1.5)
        scale = gamma / jnp.sqrt(var + 1e-5)
        bias = beta + scale * (b - mean)
        return w, scale, bias

    w_sq, sq_s, sq_b = conv(inplanes, squeeze_planes, 1)
    w_e1, e1_s, e1_b = conv(squeeze_planes, expand1x1_planes, 1)
    w_e3, e3_s, e3_b = conv(squeeze_planes, expand3x3_planes, 9)  # taps = dh*3+dw
    return {
        "w_sq": w_sq[0], "sq_scale": sq_s, "sq_bias": sq_b,
        "w_e1": w_e1[0], "e1_scale": e1_s, "e1_bias": e1_b,
        "w_e3": w_e3, "e3_scale": e3_s, "e3_bias": e3_b,
    }


def prepare_fire_params(raw):
    """Pad to small multiples (Sq -> 16, Eout -> 128), fold expand1x1 into the
    centre tap of the 3x3 weight, and cast weights to bf16."""
    cin, sq = raw["w_sq"].shape
    e1 = raw["w_e1"].shape[1]
    e3 = raw["w_e3"].shape[2]
    cin_p = _round_up(cin, 16)
    sq_p = _round_up(sq, 16)          # bf16 sublane multiple -- NOT 128 lanes
    eout = e1 + e3
    eout_p = _round_up(eout, 128)

    w_sq = jnp.zeros((cin_p, sq_p), F32).at[:cin, :sq].set(raw["w_sq"])
    sq_scale = jnp.zeros((1, sq_p), F32).at[0, :sq].set(raw["sq_scale"])
    sq_bias = jnp.zeros((1, sq_p), F32).at[0, :sq].set(raw["sq_bias"])

    # Packed expand weight: output lanes are [expand1x1 | expand3x3]; the 1x1
    # weight lives only in the centre tap (dh=1, dw=1) -> torch.cat is free.
    w_ex = jnp.zeros((9, sq_p, eout_p), F32)
    w_ex = w_ex.at[4, :sq, :e1].set(raw["w_e1"])
    w_ex = w_ex.at[:, :sq, e1:eout].set(raw["w_e3"])
    ex_scale = (jnp.zeros((1, eout_p), F32)
                .at[0, :e1].set(raw["e1_scale"])
                .at[0, e1:eout].set(raw["e3_scale"]))
    ex_bias = (jnp.zeros((1, eout_p), F32)
               .at[0, :e1].set(raw["e1_bias"])
               .at[0, e1:eout].set(raw["e3_bias"]))

    return {
        "w_sq": w_sq.astype(BF16),
        "sq_scale": sq_scale, "sq_bias": sq_bias,
        "w_ex": w_ex.reshape(9 * sq_p, eout_p).astype(BF16),
        "ex_scale": ex_scale, "ex_bias": ex_bias,
    }


# ----------------------------------------------------------------------------
# Plain-JAX f32 reference (mirrors torch Fire.forward with folded BN)
# ----------------------------------------------------------------------------

def fire_reference(x_nchw, raw):
    x = jnp.transpose(x_nchw, (0, 2, 3, 1)).astype(F32)
    n, h, wd, _ = x.shape
    s = jnp.einsum("nhwc,cs->nhws", x, raw["w_sq"]) * raw["sq_scale"] + raw["sq_bias"]
    s = jnp.maximum(s, 0.0)
    e1 = jnp.einsum("nhws,se->nhwe", s, raw["w_e1"]) * raw["e1_scale"] + raw["e1_bias"]
    e1 = jnp.maximum(e1, 0.0)
    sp = jnp.pad(s, ((0, 0), (1, 1), (1, 1), (0, 0)))
    acc = jnp.zeros(x.shape[:3] + (raw["w_e3"].shape[2],), F32)
    for dh in range(3):
        for dw in range(3):
            acc = acc + jnp.einsum("nhws,se->nhwe",
                                   sp[:, dh:dh + h, dw:dw + wd, :],
                                   raw["w_e3"][dh * 3 + dw])
    e3 = jnp.maximum(acc * raw["e3_scale"] + raw["e3_bias"], 0.0)
    y = jnp.concatenate([e1, e3], axis=-1)
    return jnp.transpose(y, (0, 3, 1, 2))


if __name__ == "__main__":
    # Fire(inplanes=64, squeeze=16, expand1x1=64, expand3x3=64) — the first
    # Fire block of RangeNet — at a small spatial size.
    N, C_IN, H, W = 2, 64, 8, 16
    SQ, E1, E3 = 16, 64, 64

    key = jax.random.PRNGKey(0)
    k_param, k_input = jax.random.split(key)
    raw = init_fire_params(k_param, C_IN, SQ, E1, E3)
    kparams = prepare_fire_params(raw)
    x = jax.random.normal(k_input, (N, C_IN, H, W), F32)

    fwd = jax.jit(functools.partial(fire_forward, eout=E1 + E3))
    out = jax.block_until_ready(fwd(x, kparams))

    assert out.shape == (N, E1 + E3, H, W), out.shape
    out32 = out.astype(F32)
    assert bool(jnp.all(jnp.isfinite(out32)))

    ref = fire_reference(x, raw)
    max_err = float(jnp.max(jnp.abs(out32 - ref)))
    assert bool(jnp.allclose(out32, ref, atol=0.1, rtol=0.1)), max_err

    print("KERNEL_OK")
</pallas_src>

<mosaic_0001>
module attributes {stable_mosaic.version = 11 : i64} {
  func.func @_fire_kernel(%arg0: i32, %arg1: i32, %arg2: memref<1x8x16x64xbf16, #tpu.memory_space<vmem>>, %arg3: memref<1x2x16x64xbf16, #tpu.memory_space<vmem>>, %arg4: memref<64x16xbf16, #tpu.memory_space<vmem>>, %arg5: memref<1x16xf32, #tpu.memory_space<vmem>>, %arg6: memref<1x16xf32, #tpu.memory_space<vmem>>, %arg7: memref<144x128xbf16, #tpu.memory_space<vmem>>, %arg8: memref<1x128xf32, #tpu.memory_space<vmem>>, %arg9: memref<1x128xf32, #tpu.memory_space<vmem>>, %arg10: memref<1x8x16x128xbf16, #tpu.memory_space<vmem>>, %arg11: memref<10x18x16xbf16, #tpu.memory_space<vmem>>, %arg12: memref<128x144xbf16, #tpu.memory_space<vmem>>) attributes {dimension_semantics = [#tpu.dimension_semantics<parallel>, #tpu.dimension_semantics<parallel>], iteration_bounds = array<i64: 2, 1>, scalar_prefetch = 0 : i64, scratch_operands = 2 : i64, tpu.core_type = #tpu.core_type<tc>, window_params = [{transform_indices = @transform_0, window_bounds = array<i64: 1, 8, 16, 64>}, {transform_indices = @transform_1, window_bounds = array<i64: 1, 2, 16, 64>}, {pipeline_mode = #tpu.pipeline_mode<synchronous>, transform_indices = @transform_2, window_bounds = array<i64: 64, 16>}, {pipeline_mode = #tpu.pipeline_mode<synchronous>, transform_indices = @transform_3, window_bounds = array<i64: 1, 16>}, {pipeline_mode = #tpu.pipeline_mode<synchronous>, transform_indices = @transform_4, window_bounds = array<i64: 1, 16>}, {pipeline_mode = #tpu.pipeline_mode<synchronous>, transform_indices = @transform_5, window_bounds = array<i64: 144, 128>}, {pipeline_mode = #tpu.pipeline_mode<synchronous>, transform_indices = @transform_6, window_bounds = array<i64: 1, 128>}, {pipeline_mode = #tpu.pipeline_mode<synchronous>, transform_indices = @transform_7, window_bounds = array<i64: 1, 128>}, {transform_indices = @transform_8, window_bounds = array<i64: 1, 8, 16, 128>}]} {
    %c0 = arith.constant 0 : index
    %c0_0 = arith.constant 0 : index
    %c0_1 = arith.constant 0 : index
    %c0_2 = arith.constant 0 : index
    %0 = vector.load %arg2[%c0, %c0_0, %c0_1, %c0_2] : memref<1x8x16x64xbf16, #tpu.memory_space<vmem>>, vector<1x8x16x64xbf16>
    %1 = vector.shape_cast %0 : vector<1x8x16x64xbf16> to vector<8x16x64xbf16>
    %2 = vector.shape_cast %1 : vector<8x16x64xbf16> to vector<128x64xbf16>
    %c0_3 = arith.constant 0 : index
    %c0_4 = arith.constant 0 : index
    %c0_5 = arith.constant 0 : index
    %c0_6 = arith.constant 0 : index
    %3 = vector.load %arg3[%c0_3, %c0_4, %c0_5, %c0_6] : memref<1x2x16x64xbf16, #tpu.memory_space<vmem>>, vector<1x2x16x64xbf16>
    %4 = vector.shape_cast %3 : vector<1x2x16x64xbf16> to vector<2x16x64xbf16>
    %5 = vector.shape_cast %4 : vector<2x16x64xbf16> to vector<32x64xbf16>
    %6 = tpu.concatenate %2, %5 in 0 : vector<128x64xbf16>, vector<32x64xbf16> -> vector<160x64xbf16>
    %c0_7 = arith.constant 0 : index
    %c0_8 = arith.constant 0 : index
    %7 = vector.load %arg4[%c0_7, %c0_8] : memref<64x16xbf16, #tpu.memory_space<vmem>>, vector<64x16xbf16>
    %cst = arith.constant dense<0.000000e+00> : vector<160x16xf32>
    %8 = tpu.matmul %6, %7, %cst {dimension_numbers = #tpu.dot_dimension_numbers<[1], [0], [0], [1], [0, 0, 1, 1], [], []>} : vector<160x64xbf16>, vector<64x16xbf16>, vector<160x16xf32> -> vector<160x16xf32>
    %c0_9 = arith.constant 0 : index
    %c0_10 = arith.constant 0 : index
    %9 = vector.load %arg5[%c0_9, %c0_10] : memref<1x16xf32, #tpu.memory_space<vmem>>, vector<1x16xf32>
    %10 = vector.broadcast %9 : vector<1x16xf32> to vector<160x16xf32>
    %11 = arith.mulf %8, %10 : vector<160x16xf32>
    %c0_11 = arith.constant 0 : index
    %c0_12 = arith.constant 0 : index
    %12 = vector.load %arg6[%c0_11, %c0_12] : memref<1x16xf32, #tpu.memory_space<vmem>>, vector<1x16xf32>
    %13 = vector.broadcast %12 : vector<1x16xf32> to vector<160x16xf32>
    %14 = arith.addf %11, %13 : vector<160x16xf32>
    %cst_13 = arith.constant 0.000000e+00 : f32
    %15 = vector.broadcast %cst_13 : f32 to vector<160x16xf32>
    %16 = arith.maximumf %14, %15 : vector<160x16xf32>
    %17 = vector.shape_cast %16 : vector<160x16xf32> to vector<10x16x16xf32>
    %c8_i32 = arith.constant 8 : i32
    %18 = arith.muli %arg1, %c8_i32 : i32
    %19 = tpu.iota {dimensions = array<i32: 0>} : vector<10x1x1xi32>
    %20 = vector.broadcast %18 : i32 to vector<10x1x1xi32>
    %21 = arith.addi %20, %19 : vector<10x1x1xi32>
    %c1_i32 = arith.constant 1 : i32
    %22 = vector.broadcast %c1_i32 : i32 to vector<10x1x1xi32>
    %23 = arith.cmpi sge, %21, %22 : vector<10x1x1xi32>
    %c8_i32_14 = arith.constant 8 : i32
    %24 = vector.broadcast %c8_i32_14 : i32 to vector<10x1x1xi32>
    %25 = arith.cmpi sle, %21, %24 : vector<10x1x1xi32>
    %26 = arith.andi %23, %25 : vector<10x1x1xi1>
    %cst_15 = arith.constant 0.000000e+00 : f32
    %27 = vector.shape_cast %26 : vector<10x1x1xi1> to vector<10x1x1xi1>
    %28 = vector.broadcast %27 : vector<10x1x1xi1> to vector<10x16x16xi1>
    %29 = vector.broadcast %cst_15 : f32 to vector<10x16x16xf32>
    %30 = arith.select %28, %17, %29 : vector<10x16x16xi1>, vector<10x16x16xf32>
    %cst_16 = arith.constant 0.000000e+00 : bf16
    %31 = vector.broadcast %cst_16 : bf16 to vector<10x1x16xbf16>
    %c0_17 = arith.constant 0 : index
    %c0_18 = arith.constant 0 : index
    %c0_19 = arith.constant 0 : index
    %32 = vector.load %arg11[%c0_17, %c0_18, %c0_19] : memref<10x18x16xbf16, #tpu.memory_space<vmem>>, vector<10x1x16xbf16>
    tpu.vector_store %arg11[%c0_17, %c0_18, %c0_19], %31 {strides = array<i32>} : memref<10x18x16xbf16, #tpu.memory_space<vmem>>, vector<10x1x16xbf16>,
    %c0_20 = arith.constant 0 : index
    %c17 = arith.constant 17 : index
    %c0_21 = arith.constant 0 : index
    %33 = vector.load %arg11[%c0_20, %c17, %c0_21] : memref<10x18x16xbf16, #tpu.memory_space<vmem>>, vector<10x1x16xbf16>
    tpu.vector_store %arg11[%c0_20, %c17, %c0_21], %31 {strides = array<i32>} : memref<10x18x16xbf16, #tpu.memory_space<vmem>>, vector<10x1x16xbf16>,
    %34 = arith.truncf %30 : vector<10x16x16xf32> to vector<10x16x16xbf16>
    %c0_22 = arith.constant 0 : index
    %c1 = arith.constant 1 : index
    %c0_23 = arith.constant 0 : index
    %35 = vector.load %arg11[%c0_22, %c1, %c0_23] : memref<10x18x16xbf16, #tpu.memory_space<vmem>>, vector<10x16x16xbf16>
    tpu.vector_store %arg11[%c0_22, %c1, %c0_23], %34 {strides = array<i32>} : memref<10x18x16xbf16, #tpu.memory_space<vmem>>, vector<10x16x16xbf16>,
    %c0_24 = arith.constant 0 : index
    %c0_25 = arith.constant 0 : index
    %c0_26 = arith.constant 0 : index
    %36 = vector.load %arg11[%c0_24, %c0_25, %c0_26] : memref<10x18x16xbf16, #tpu.memory_space<vmem>>, vector<8x16x16xbf16>
    %37 = vector.shape_cast %36 : vector<8x16x16xbf16> to vector<128x16xbf16>
    %c0_27 = arith.constant 0 : index
    %c0_28 = arith.constant 0 : index
    %38 = vector.load %arg12[%c0_27, %c0_28] : memref<128x144xbf16, #tpu.memory_space<vmem>>, vector<128x16xbf16>
    tpu.vector_store %arg12[%c0_27, %c0_28], %37 {strides = array<i32>} : memref<128x144xbf16, #tpu.memory_space<vmem>>, vector<128x16xbf16>,
    %c0_29 = arith.constant 0 : index
    %c1_30 = arith.constant 1 : index
    %c0_31 = arith.constant 0 : index
    %39 = vector.load %arg11[%c0_29, %c1_30, %c0_31] : memref<10x18x16xbf16, #tpu.memory_space<vmem>>, vector<8x16x16xbf16>
    %40 = vector.shape_cast %39 : vector<8x16x16xbf16> to vector<128x16xbf16>
    %c0_32 = arith.constant 0 : index
    %c16 = arith.constant 16 : index
    %41 = vector.load %arg12[%c0_32, %c16] : memref<128x144xbf16, #tpu.memory_space<vmem>>, vector<128x16xbf16>
    tpu.vector_store %arg12[%c0_32, %c16], %40 {strides = array<i32>} : memref<128x144xbf16, #tpu.memory_space<vmem>>, vector<128x16xbf16>,
    %c0_33 = arith.constant 0 : index
    %c2 = arith.constant 2 : index
    %c0_34 = arith.constant 0 : index
    %42 = vector.load %arg11[%c0_33, %c2, %c0_34] : memref<10x18x16xbf16, #tpu.memory_space<vmem>>, vector<8x16x16xbf16>
    %43 = vector.shape_cast %42 : vector<8x16x16xbf16> to vector<128x16xbf16>
    %c0_35 = arith.constant 0 : index
    %c32 = arith.constant 32 : index
    %44 = vector.load %arg12[%c0_35, %c32] : memref<128x144xbf16, #tpu.memory_space<vmem>>, vector<128x16xbf16>
    tpu.vector_store %arg12[%c0_35, %c32], %43 {strides = array<i32>} : memref<128x144xbf16, #tpu.memory_space<vmem>>, vector<128x16xbf16>,
    %c1_36 = arith.constant 1 : index
    %c0_37 = arith.constant 0 : index
    %c0_38 = arith.constant 0 : index
    %45 = vector.load %arg11[%c1_36, %c0_37, %c0_38] : memref<10x18x16xbf16, #tpu.memory_space<vmem>>, vector<8x16x16xbf16>
    %46 = vector.shape_cast %45 : vector<8x16x16xbf16> to vector<128x16xbf16>
    %c0_39 = arith.constant 0 : index
    %c48 = arith.constant 48 : index
    %47 = vector.load %arg12[%c0_39, %c48] : memref<128x144xbf16, #tpu.memory_space<vmem>>, vector<128x16xbf16>
    tpu.vector_store %arg12[%c0_39, %c48], %46 {strides = array<i32>} : memref<128x144xbf16, #tpu.memory_space<vmem>>, vector<128x16xbf16>,
    %c1_40 = arith.constant 1 : index
    %c1_41 = arith.constant 1 : index
    %c0_42 = arith.constant 0 : index
    %48 = vector.load %arg11[%c1_40, %c1_41, %c0_42] : memref<10x18x16xbf16, #tpu.memory_space<vmem>>, vector<8x16x16xbf16>
    %49 = vector.shape_cast %48 : vector<8x16x16xbf16> to vector<128x16xbf16>
    %c0_43 = arith.constant 0 : index
    %c64 = arith.constant 64 : index
    %50 = vector.load %arg12[%c0_43, %c64] : memref<128x144xbf16, #tpu.memory_space<vmem>>, vector<128x16xbf16>
    tpu.vector_store %arg12[%c0_43, %c64], %49 {strides = array<i32>} : memref<128x144xbf16, #tpu.memory_space<vmem>>, vector<128x16xbf16>,
    %c1_44 = arith.constant 1 : index
    %c2_45 = arith.constant 2 : index
    %c0_46 = arith.constant 0 : index
    %51 = vector.load %arg11[%c1_44, %c2_45, %c0_46] : memref<10x18x16xbf16, #tpu.memory_space<vmem>>, vector<8x16x16xbf16>
    %52 = vector.shape_cast %51 : vector<8x16x16xbf16> to vector<128x16xbf16>
    %c0_47 = arith.constant 0 : index
    %c80 = arith.constant 80 : index
    %53 = vector.load %arg12[%c0_47, %c80] : memref<128x144xbf16, #tpu.memory_space<vmem>>, vector<128x16xbf16>
    tpu.vector_store %arg12[%c0_47, %c80], %52 {strides = array<i32>} : memref<128x144xbf16, #tpu.memory_space<vmem>>, vector<128x16xbf16>,
    %c2_48 = arith.constant 2 : index
    %c0_49 = arith.constant 0 : index
    %c0_50 = arith.constant 0 : index
    %54 = vector.load %arg11[%c2_48, %c0_49, %c0_50] : memref<10x18x16xbf16, #tpu.memory_space<vmem>>, vector<8x16x16xbf16>
    %55 = vector.shape_cast %54 : vector<8x16x16xbf16> to vector<128x16xbf16>
    %c0_51 = arith.constant 0 : index
    %c96 = arith.constant 96 : index
    %56 = vector.load %arg12[%c0_51, %c96] : memref<128x144xbf16, #tpu.memory_space<vmem>>, vector<128x16xbf16>
    tpu.vector_store %arg12[%c0_51, %c96], %55 {strides = array<i32>} : memref<128x144xbf16, #tpu.memory_space<vmem>>, vector<128x16xbf16>,
    %c2_52 = arith.constant 2 : index
    %c1_53 = arith.constant 1 : index
    %c0_54 = arith.constant 0 : index
    %57 = vector.load %arg11[%c2_52, %c1_53, %c0_54] : memref<10x18x16xbf16, #tpu.memory_space<vmem>>, vector<8x16x16xbf16>
    %58 = vector.shape_cast %57 : vector<8x16x16xbf16> to vector<128x16xbf16>
    %c0_55 = arith.constant 0 : index
    %c112 = arith.constant 112 : index
    %59 = vector.load %arg12[%c0_55, %c112] : memref<128x144xbf16, #tpu.memory_space<vmem>>, vector<128x16xbf16>
    tpu.vector_store %arg12[%c0_55, %c112], %58 {strides = array<i32>} : memref<128x144xbf16, #tpu.memory_space<vmem>>, vector<128x16xbf16>,
    %c2_56 = arith.constant 2 : index
    %c2_57 = arith.constant 2 : index
    %c0_58 = arith.constant 0 : index
    %60 = vector.load %arg11[%c2_56, %c2_57, %c0_58] : memref<10x18x16xbf16, #tpu.memory_space<vmem>>, vector<8x16x16xbf16>
    %61 = vector.shape_cast %60 : vector<8x16x16xbf16> to vector<128x16xbf16>
    %c0_59 = arith.constant 0 : index
    %c128 = arith.constant 128 : index
    %62 = vector.load %arg12[%c0_59, %c128] : memref<128x144xbf16, #tpu.memory_space<vmem>>, vector<128x16xbf16>
    tpu.vector_store %arg12[%c0_59, %c128], %61 {strides = array<i32>} : memref<128x144xbf16, #tpu.memory_space<vmem>>, vector<128x16xbf16>,
    %c0_60 = arith.constant 0 : index
    %c0_61 = arith.constant 0 : index
    %63 = vector.load %arg12[%c0_60, %c0_61] : memref<128x144xbf16, #tpu.memory_space<vmem>>, vector<128x144xbf16>
    %c0_62 = arith.constant 0 : index
    %c0_63 = arith.constant 0 : index
    %64 = vector.load %arg7[%c0_62, %c0_63] : memref<144x128xbf16, #tpu.memory_space<vmem>>, vector<144x128xbf16>
    %cst_64 = arith.constant dense<0.000000e+00> : vector<128x128xf32>
    %65 = tpu.matmul %63, %64, %cst_64 {dimension_numbers = #tpu.dot_dimension_numbers<[1], [0], [0], [1], [0, 0, 1, 1], [], []>} : vector<128x144xbf16>, vector<144x128xbf16>, vector<128x128xf32> -> vector<128x128xf32>
    %c0_65 = arith.constant 0 : index
    %c0_66 = arith.constant 0 : index
    %66 = vector.load %arg8[%c0_65, %c0_66] : memref<1x128xf32, #tpu.memory_space<vmem>>, vector<1x128xf32>
    %67 = vector.broadcast %66 : vector<1x128xf32> to vector<128x128xf32>
    %68 = arith.mulf %65, %67 : vector<128x128xf32>
    %c0_67 = arith.constant 0 : index
    %c0_68 = arith.constant 0 : index
    %69 = vector.load %arg9[%c0_67, %c0_68] : memref<1x128xf32, #tpu.memory_space<vmem>>, vector<1x128xf32>
    %70 = vector.broadcast %69 : vector<1x128xf32> to vector<128x128xf32>
    %71 = arith.addf %68, %70 : vector<128x128xf32>
    %cst_69 = arith.constant 0.000000e+00 : f32
    %72 = vector.broadcast %cst_69 : f32 to vector<128x128xf32>
    %73 = arith.maximumf %71, %72 : vector<128x128xf32>
    %74 = vector.shape_cast %73 : vector<128x128xf32> to vector<8x16x128xf32>
    %75 = arith.truncf %74 : vector<8x16x128xf32> to vector<8x16x128xbf16>
    %c0_70 = arith.constant 0 : index
    %c0_71 = arith.constant 0 : index
    %c0_72 = arith.constant 0 : index
    %c0_73 = arith.constant 0 : index
    %76 = vector.load %arg10[%c0_70, %c0_71, %c0_72, %c0_73] : memref<1x8x16x128xbf16, #tpu.memory_space<vmem>>, vector<1x8x16x128xbf16>
    %77 = vector.shape_cast %76 : vector<1x8x16x128xbf16> to vector<8x16x128xbf16>
    %78 = vector.shape_cast %75 : vector<8x16x128xbf16> to vector<1x8x16x128xbf16>
    tpu.vector_store %arg10[%c0_70, %c0_71, %c0_72, %c0_73], %78 {strides = array<i32>} : memref<1x8x16x128xbf16, #tpu.memory_space<vmem>>, vector<1x8x16x128xbf16>,
    return
  }
  func.func @transform_0(%arg0: i32, %arg1: i32) -> (i32, i32, i32, i32) {
    %c0_i32 = arith.constant 0 : i32
    %c0_i32_0 = arith.constant 0 : i32
    %c0_i32_1 = arith.constant 0 : i32
    return %arg0, %arg1, %c0_i32, %c0_i32_0 : i32, i32, i32, i32
  }
  func.func @transform_1(%arg0: i32, %arg1: i32) -> (i32, i32, i32, i32) {
    %c1_i32 = arith.constant 1 : i32
    %0 = arith.addi %arg1, %c1_i32 : i32
    %c4_i32 = arith.constant 4 : i32
    %1 = arith.muli %0, %c4_i32 : i32
    %c0_i32 = arith.constant 0 : i32
    %c0_i32_0 = arith.constant 0 : i32
    %c0_i32_1 = arith.constant 0 : i32
    return %arg0, %1, %c0_i32, %c0_i32_0 : i32, i32, i32, i32
  }
  func.func @transform_2(%arg0: i32, %arg1: i32) -> (i32, i32) {
    %c0_i32 = arith.constant 0 : i32
    %c0_i32_0 = arith.constant 0 : i32
    %c0_i32_1 = arith.constant 0 : i32
    return %c0_i32, %c0_i32_0 : i32, i32
  }
  func.func @transform_3(%arg0: i32, %arg1: i32) -> (i32, i32) {
    %c0_i32 = arith.constant 0 : i32
    %c0_i32_0 = arith.constant 0 : i32
    %c0_i32_1 = arith.constant 0 : i32
    return %c0_i32, %c0_i32_0 : i32, i32
  }
  func.func @transform_4(%arg0: i32, %arg1: i32) -> (i32, i32) {
    %c0_i32 = arith.constant 0 : i32
    %c0_i32_0 = arith.constant 0 : i32
    %c0_i32_1 = arith.constant 0 : i32
    return %c0_i32, %c0_i32_0 : i32, i32
  }
  func.func @transform_5(%arg0: i32, %arg1: i32) -> (i32, i32) {
    %c0_i32 = arith.constant 0 : i32
    %c0_i32_0 = arith.constant 0 : i32
    %c0_i32_1 = arith.constant 0 : i32
    return %c0_i32, %c0_i32_0 : i32, i32
  }
  func.func @transform_6(%arg0: i32, %arg1: i32) -> (i32, i32) {
    %c0_i32 = arith.constant 0 : i32
    %c0_i32_0 = arith.constant 0 : i32
    %c0_i32_1 = arith.constant 0 : i32
    return %c0_i32, %c0_i32_0 : i32, i32
  }
  func.func @transform_7(%arg0: i32, %arg1: i32) -> (i32, i32) {
    %c0_i32 = arith.constant 0 : i32
    %c0_i32_0 = arith.constant 0 : i32
    %c0_i32_1 = arith.constant 0 : i32
    return %c0_i32, %c0_i32_0 : i32, i32
  }
  func.func @transform_8(%arg0: i32, %arg1: i32) -> (i32, i32, i32, i32) {
    %c0_i32 = arith.constant 0 : i32
    %c0_i32_0 = arith.constant 0 : i32
    %c0_i32_1 = arith.constant 0 : i32
    return %arg0, %arg1, %c0_i32, %c0_i32_0 : i32, i32, i32, i32
  }
}

</mosaic_0001>

<llo_original>
// kernel: fire_forward.1
$region0: #{fire_forward.1}
  #allocation0 [shape = 'u32[]', space=smem, size = 0x4, offset = 0x4, fixed_abs, tag = 'smem constant byte address 0x4 - core index']
  #allocation1 [shape = 'u32[144,128]{1,0:T(1,128)}', space=vmem, size = 0x12000, scoped, tag = 'internal scratch']
  #allocation2 [shape = 'bf16[10,18,16]{2,1,0:T(8,128)(2,1)}', space=vmem, size = 0xf000, scoped, tag = 'scratch operand']
  #allocation3 [shape = 'bf16[128,144]{1,0:T(16,128)(2,1)}', space=vmem, size = 0x10000, scoped, tag = 'scratch operand']
  %s0 = inlined_call_operand.vmem [shape: bf16[2,10,16,64], index: 0, kind: input, shape index: {}, may-alias: {0,1}]
  %s1 = inlined_call_operand.vmem [shape: bf16[2,10,16,64], index: 1, kind: input, shape index: {}, may-alias: {0,1}]
  %s2 = inlined_call_operand.vmem [shape: bf16[64,16], index: 2, kind: input, shape index: {}]
  %s3 = inlined_call_operand.vmem [shape: f32[1,16], index: 3, kind: input, shape index: {}]
  %s4 = inlined_call_operand.vmem [shape: f32[1,16], index: 4, kind: input, shape index: {}]
  %s5 = inlined_call_operand.vmem [shape: bf16[144,128], index: 5, kind: input, shape index: {}]
  %s6 = inlined_call_operand.vmem [shape: f32[1,128], index: 6, kind: input, shape index: {}]
  %s7 = inlined_call_operand.vmem [shape: f32[1,128], index: 7, kind: input, shape index: {}]
  %s8 = inlined_call_operand.hbm [shape: bf16[2,8,16,128], index: 8, kind: output, shape index: {}]
  %s9 = sld [smem:[#allocation0]]
  $region65: #{fire_forward.1} parent=0
    _
  %s11 = ssub.s32 1, %s9
  %s12 = scalar_select 0, %s11, %s9
  $region1: #{fire_forward.1} parent=0
    #allocation4 [shape = 'u8[65536]{0}', space=vmem, size = 0x10000, scoped, tag = 'output window, operand 0']
    #allocation5 [shape = 's32[2]{0}', space=sflag, size = 0x8, scoped, tag = 'scoped memory for fire_forward.1']
    %13 = vsyncpa [#allocation5], 0
    %s14 = scalar_lea.sflag [#allocation5], 1
    %15 = vsyncpa %s14, 0
    loop: start=0, step=1, limit=4
    $region2: #{fire_forward.1} parent=1 // loop_pre_header
      _
    $region3: #{fire_forward.1} parent=1 // loop_header
      %s17 = sphi 0, %s21
      %p18 = scmp.ge.s32.totalorder %s17, 4
      %s24 = sphi 0, %s36
      %s25 = sphi 0, %s32
      %s26 = sphi 0, %s24
      %s27 = sphi 0, %s25
      %s28 = sphi 0, %s26
      %s29 = sphi 0, %s27
      %s41 = sphi 0, %s43
      %s44 = sphi 0, %s41
      %s45 = sphi 0, %s44
      %s61 = sphi 0, %s45
      %s73 = sphi 0, %s75
      %s76 = sphi 0, %s73
      %s77 = sphi 0, %s76
      %s93 = sphi 0, %s77
      %s97 = sphi 0, %s97
      %s99 = sphi 0, %s97
      %s100 = sphi 0, %s99
      %s114 = sphi 0, %s100
      %s118 = sphi 0, %s118
      %s120 = sphi 0, %s118
      %s121 = sphi 0, %s120
      %s135 = sphi 0, %s121
      %s139 = sphi 0, %s139
      %s141 = sphi 0, %s139
      %s142 = sphi 0, %s141
      %s156 = sphi 0, %s142
      %s160 = sphi 0, %s160
      %s162 = sphi 0, %s160
      %s163 = sphi 0, %s162
      %s177 = sphi 0, %s163
      %s181 = sphi 0, %s181
      %s183 = sphi 0, %s181
      %s184 = sphi 0, %s183
      %s198 = sphi 0, %s184
      %s202 = sphi 0, %s202
      %s204 = sphi 0, %s202
      %s205 = sphi 0, %s204
      %s219 = sphi 0, %s205
      %s227 = sphi 0, %s229
      %s230 = sphi 0, %s227
      %s231 = sphi 0, %s230
      %s247 = sphi 0, %s231
    $region4: #{fire_forward.1} parent=1 // loop_header_branch
      %20 = sbr.rel (%p18) target = $region8
    $region5: #{fire_forward.1} parent=1 // loop_body
      %s22 = ssub.s32 %s17, 1
      %s23 = ssub.s32 %s17, 2
      %s30 = sadd.s32 1, %s25
      %p31 = scmp.ge.s32.totalorder %s30, 1
      %s32 = scalar_select %p31, 0, %s30
      %s33 = sadd.s32 1, %s24
      %s34 = scalar_select %p31, %s33, %s24
      %p35 = scmp.ge.s32.totalorder %s34, 2
      %s36 = scalar_select %p35, 0, %s34
      %s37 = ssub.s32 %s24, %s36
      %s38 = ssub.s32 %s25, %s32
      %s39 = sor.u32 %s37, %s38
      %p40 = scmp.eq.s32.totalorder %s39, 0
      %s42 = sadd.s32 %s41, 1
      %s43 = scalar_select %p40, %s41, %s42
      %p46 = pneg %p40
      %p47 = scmp.eq.s32.totalorder %s17, 1
      %p48 = por %p46, %p47
      %p49 = scmp.ne.s32.totalorder %s41, %s44
      %p50 = scmp.eq.s32.totalorder %s17, 0
      %p51 = por %p49, %p50
      %p52 = scmp.ne.s32.totalorder %s41, %s44
      %p53 = scmp.eq.s32.totalorder %s22, 1
      %p54 = por %p52, %p53
      %p55 = scmp.ne.s32.totalorder %s44, %s45
      %p56 = scmp.eq.s32.totalorder %s22, 0
      %p57 = por %p55, %p56
      %p58 = scmp.ne.s32.totalorder %s44, %s45
      %p59 = scmp.eq.s32.totalorder %s23, 1
      %p60 = por %p58, %p59
      %p62 = scmp.ne.s32.totalorder %s45, %s61
      %p63 = scmp.eq.s32.totalorder %s23, 0
      %p64 = por %p62, %p63
      %s65 = sadd.s32 %s25, 1
      %s66 = smul.u32 %s65, 4
      %s67 = sadd.s32 %s32, 1
      %s68 = smul.u32 %s67, 4
      %s69 = ssub.s32 %s24, %s36
      %s70 = ssub.s32 %s66, %s68
      %s71 = sor.u32 %s69, %s70
      %p72 = scmp.eq.s32.totalorder %s71, 0
      %s74 = sadd.s32 %s73, 1
      %s75 = scalar_select %p72, %s73, %s74
      %p78 = pneg %p72
      %p79 = scmp.eq.s32.totalorder %s17, 1
      %p80 = por %p78, %p79
      %p81 = scmp.ne.s32.totalorder %s73, %s76
      %p82 = scmp.eq.s32.totalorder %s17, 0
      %p83 = por %p81, %p82
      %p84 = scmp.ne.s32.totalorder %s73, %s76
      %p85 = scmp.eq.s32.totalorder %s22, 1
      %p86 = por %p84, %p85
      %p87 = scmp.ne.s32.totalorder %s76, %s77
      %p88 = scmp.eq.s32.totalorder %s22, 0
      %p89 = por %p87, %p88
      %p90 = scmp.ne.s32.totalorder %s76, %s77
      %p91 = scmp.eq.s32.totalorder %s23, 1
      %p92 = por %p90, %p91
      %p94 = scmp.ne.s32.totalorder %s77, %s93
      %p95 = scmp.eq.s32.totalorder %s23, 0
      %p96 = por %p94, %p95
      %s98 = sadd.s32 %s97, 1
      %p101 = scmp.eq.s32.totalorder %s17, 1
      %p102 = scmp.ne.s32.totalorder %s97, %s99
      %p103 = scmp.eq.s32.totalorder %s17, 0
      %p104 = por %p102, %p103
      %p105 = scmp.ne.s32.totalorder %s97, %s99
      %p106 = scmp.eq.s32.totalorder %s22, 1
      %p107 = por %p105, %p106
      %p108 = scmp.ne.s32.totalorder %s99, %s100
      %p109 = scmp.eq.s32.totalorder %s22, 0
      %p110 = por %p108, %p109
      %p111 = scmp.ne.s32.totalorder %s99, %s100
      %p112 = scmp.eq.s32.totalorder %s23, 1
      %p113 = por %p111, %p112
      %p115 = scmp.ne.s32.totalorder %s100, %s114
      %p116 = scmp.eq.s32.totalorder %s23, 0
      %p117 = por %p115, %p116
      %s119 = sadd.s32 %s118, 1
      %p122 = scmp.eq.s32.totalorder %s17, 1
      %p123 = scmp.ne.s32.totalorder %s118, %s120
      %p124 = scmp.eq.s32.totalorder %s17, 0
      %p125 = por %p123, %p124
      %p126 = scmp.ne.s32.totalorder %s118, %s120
      %p127 = scmp.eq.s32.totalorder %s22, 1
      %p128 = por %p126, %p127
      %p129 = scmp.ne.s32.totalorder %s120, %s121
      %p130 = scmp.eq.s32.totalorder %s22, 0
      %p131 = por %p129, %p130
      %p132 = scmp.ne.s32.totalorder %s120, %s121
      %p133 = scmp.eq.s32.totalorder %s23, 1
      %p134 = por %p132, %p133
      %p136 = scmp.ne.s32.totalorder %s121, %s135
      %p137 = scmp.eq.s32.totalorder %s23, 0
      %p138 = por %p136, %p137
      %s140 = sadd.s32 %s139, 1
      %p143 = scmp.eq.s32.totalorder %s17, 1
      %p144 = scmp.ne.s32.totalorder %s139, %s141
      %p145 = scmp.eq.s32.totalorder %s17, 0
      %p146 = por %p144, %p145
      %p147 = scmp.ne.s32.totalorder %s139, %s141
      %p148 = scmp.eq.s32.totalorder %s22, 1
      %p149 = por %p147, %p148
      %p150 = scmp.ne.s32.totalorder %s141, %s142
      %p151 = scmp.eq.s32.totalorder %s22, 0
      %p152 = por %p150, %p151
      %p153 = scmp.ne.s32.totalorder %s141, %s142
      %p154 = scmp.eq.s32.totalorder %s23, 1
      %p155 = por %p153, %p154
      %p157 = scmp.ne.s32.totalorder %s142, %s156
      %p158 = scmp.eq.s32.totalorder %s23, 0
      %p159 = por %p157, %p158
      %s161 = sadd.s32 %s160, 1
      %p164 = scmp.eq.s32.totalorder %s17, 1
      %p165 = scmp.ne.s32.totalorder %s160, %s162
      %p166 = scmp.eq.s32.totalorder %s17, 0
      %p167 = por %p165, %p166
      %p168 = scmp.ne.s32.totalorder %s160, %s162
      %p169 = scmp.eq.s32.totalorder %s22, 1
      %p170 = por %p168, %p169
      %p171 = scmp.ne.s32.totalorder %s162, %s163
      %p172 = scmp.eq.s32.totalorder %s22, 0
      %p173 = por %p171, %p172
      %p174 = scmp.ne.s32.totalorder %s162, %s163
      %p175 = scmp.eq.s32.totalorder %s23, 1
      %p176 = por %p174, %p175
      %p178 = scmp.ne.s32.totalorder %s163, %s177
      %p179 = scmp.eq.s32.totalorder %s23, 0
      %p180 = por %p178, %p179
      %s182 = sadd.s32 %s181, 1
      %p185 = scmp.eq.s32.totalorder %s17, 1
      %p186 = scmp.ne.s32.totalorder %s181, %s183
      %p187 = scmp.eq.s32.totalorder %s17, 0
      %p188 = por %p186, %p187
      %p189 = scmp.ne.s32.totalorder %s181, %s183
      %p190 = scmp.eq.s32.totalorder %s22, 1
      %p191 = por %p189, %p190
      %p192 = scmp.ne.s32.totalorder %s183, %s184
      %p193 = scmp.eq.s32.totalorder %s22, 0
      %p194 = por %p192, %p193
      %p195 = scmp.ne.s32.totalorder %s183, %s184
      %p196 = scmp.eq.s32.totalorder %s23, 1
      %p197 = por %p195, %p196
      %p199 = scmp.ne.s32.totalorder %s184, %s198
      %p200 = scmp.eq.s32.totalorder %s23, 0
      %p201 = por %p199, %p200
      %s203 = sadd.s32 %s202, 1
      %p206 = scmp.eq.s32.totalorder %s17, 1
      %p207 = scmp.ne.s32.totalorder %s202, %s204
      %p208 = scmp.eq.s32.totalorder %s17, 0
      %p209 = por %p207, %p208
      %p210 = scmp.ne.s32.totalorder %s202, %s204
      %p211 = scmp.eq.s32.totalorder %s22, 1
      %p212 = por %p210, %p211
      %p213 = scmp.ne.s32.totalorder %s204, %s205
      %p214 = scmp.eq.s32.totalorder %s22, 0
      %p215 = por %p213, %p214
      %p216 = scmp.ne.s32.totalorder %s204, %s205
      %p217 = scmp.eq.s32.totalorder %s23, 1
      %p218 = por %p216, %p217
      %p220 = scmp.ne.s32.totalorder %s205, %s219
      %p221 = scmp.eq.s32.totalorder %s23, 0
      %p222 = por %p220, %p221
      %s223 = ssub.s32 %s24, %s36
      %s224 = ssub.s32 %s25, %s32
      %s225 = sor.u32 %s223, %s224
      %p226 = scmp.eq.s32.totalorder %s225, 0
      %s228 = sadd.s32 %s227, 1
      %s229 = scalar_select %p226, %s227, %s228
      %p232 = pneg %p226
      %p233 = scmp.eq.s32.totalorder %s17, 1
      %p234 = por %p232, %p233
      %p235 = scmp.ne.s32.totalorder %s227, %s230
      %p236 = scmp.eq.s32.totalorder %s17, 0
      %p237 = por %p235, %p236
      %p238 = scmp.ne.s32.totalorder %s227, %s230
      %p239 = scmp.eq.s32.totalorder %s22, 1
      %p240 = por %p238, %p239
      %p241 = scmp.ne.s32.totalorder %s230, %s231
      %p242 = scmp.eq.s32.totalorder %s22, 0
      %p243 = por %p241, %p242
      %p244 = scmp.ne.s32.totalorder %s230, %s231
      %p245 = scmp.eq.s32.totalorder %s23, 1
      %p246 = por %p244, %p245
      %p248 = scmp.ne.s32.totalorder %s231, %s247
      %p249 = scmp.eq.s32.totalorder %s23, 0
      %p250 = por %p248, %p249
      %p251 = scmp.le.s32.totalorder 1, %s17
      %p252 = scmp.lt.s32.totalorder %s17, 3
      %p253 = pnand %p251, %p252
      %p254 = pneg %p253
      // Predicated region
      $region9: #{fire_forward.1} parent=5 // pred_check
        _
      $region10: #{fire_forward.1} parent=5 // pred_check_branch
        %256 = sbr.rel (%p253) target = $region12
      $region11: #{fire_forward.1} parent=5 // pred_region
        %s257 = ssub.s32 %s17, 1
        // Predicated region
        $region13: #{fire_forward.1} parent=11 // pred_check
          %p258 = pneg %p110
        $region14: #{fire_forward.1} parent=11 // pred_check_branch
          %260 = sbr.rel (%p258) target = $region16
        $region15: #{fire_forward.1} parent=11 // pred_region
          _
        $region16: #{fire_forward.1} parent=11 // pred_fallthru
          _
        // Predicated region
        $region17: #{fire_forward.1} parent=11 // pred_check
          %p261 = pneg %p131
        $region18: #{fire_forward.1} parent=11 // pred_check_branch
          %263 = sbr.rel (%p261) target = $region20
        $region19: #{fire_forward.1} parent=11 // pred_region
          _
        $region20: #{fire_forward.1} parent=11 // pred_fallthru
          _
        // Predicated region
        $region21: #{fire_forward.1} parent=11 // pred_check
          %p264 = pneg %p152
        $region22: #{fire_forward.1} parent=11 // pred_check_branch
          %266 = sbr.rel (%p264) target = $region24
        $region23: #{fire_forward.1} parent=11 // pred_region
          _
        $region24: #{fire_forward.1} parent=11 // pred_fallthru
          _
        // Predicated region
        $region25: #{fire_forward.1} parent=11 // pred_check
          %p267 = pneg %p173
        $region26: #{fire_forward.1} parent=11 // pred_check_branch
          %269 = sbr.rel (%p267) target = $region28
        $region27: #{fire_forward.1} parent=11 // pred_region
          _
        $region28: #{fire_forward.1} parent=11 // pred_fallthru
          _
        // Predicated region
        $region29: #{fire_forward.1} parent=11 // pred_check
          %p270 = pneg %p194
        $region30: #{fire_forward.1} parent=11 // pred_check_branch
          %272 = sbr.rel (%p270) target = $region32
        $region31: #{fire_forward.1} parent=11 // pred_region
          _
        $region32: #{fire_forward.1} parent=11 // pred_fallthru
          _
        // Predicated region
        $region33: #{fire_forward.1} parent=11 // pred_check
          %p273 = pneg %p215
        $region34: #{fire_forward.1} parent=11 // pred_check_branch
          %275 = sbr.rel (%p273) target = $region36
        $region35: #{fire_forward.1} parent=11 // pred_region
          _
        $region36: #{fire_forward.1} parent=11 // pred_fallthru
          _
      $region12: #{fire_forward.1} parent=5 // pred_fallthru
        _
      %p276 = scmp.lt.s32.totalorder %s17, 2
      // Predicated region
      $region37: #{fire_forward.1} parent=5 // pred_check
        %p277 = pneg %p276
      $region38: #{fire_forward.1} parent=5 // pred_check_branch
        %279 = sbr.rel (%p277) target = $region40
      $region39: #{fire_forward.1} parent=5 // pred_region
        // Predicated region
        $region41: #{fire_forward.1} parent=39 // pred_check
          %p280 = pneg %p51
        $region42: #{fire_forward.1} parent=39 // pred_check_branch
          %282 = sbr.rel (%p280) target = $region44
        $region43: #{fire_forward.1} parent=39 // pred_region
          %s283 = smul.u32 8, %s25
          %s284 = ssub.s32 10, %s283
          %p285 = scmp.lt.s32.totalorder %s284, 8
          %s286 = scalar_select %p285, %s284, 8
          %s287 = smul.u32 64, %s286
          %s288 = smul.u32 %s287, 2
          %p289 = scmp.lt.s32.totalorder %s24, 1
          %s290 = scalar_select %p289, %s24, 1
          %p291 = scmp.lt.s32.totalorder %s283, 9
          %s292 = scalar_select %p291, %s283, 9
          %s293 = smul.addr %s292, 2
          %s294 = smul.addr %s290, 20
          %s295 = sadd.s32 %s293, %s294
          %s296 = smul.addr %s295, 4
          %s297 = scalar_lea.vmem %s0, %s296
          %s298 = smul.u32 8, %s25
          %s299 = ssub.s32 10, %s298
          %p300 = scmp.lt.s32.totalorder %s299, 8
          %s301 = scalar_select %p300, %s299, 8
          %s302 = smul.u32 64, %s301
          %s303 = smul.u32 %s302, 2
        $region44: #{fire_forward.1} parent=39 // pred_fallthru
          _
        // Predicated region
        $region45: #{fire_forward.1} parent=39 // pred_check
          %p304 = pneg %p83
        $region46: #{fire_forward.1} parent=39 // pred_check_branch
          %306 = sbr.rel (%p304) target = $region48
        $region47: #{fire_forward.1} parent=39 // pred_region
          %s307 = sadd.s32 %s25, 1
          %s308 = smul.u32 %s307, 4
          %s309 = smul.u32 2, %s308
          %p310 = scmp.lt.s32.totalorder %s24, 1
          %s311 = scalar_select %p310, %s24, 1
          %p312 = scmp.lt.s32.totalorder %s309, 9
          %s313 = scalar_select %p312, %s309, 9
          %s314 = smul.addr %s313, 2
          %s315 = smul.addr %s311, 20
          %s316 = sadd.s32 %s314, %s315
          %s317 = smul.addr %s316, 4
          %s318 = scalar_lea.vmem %s1, %s317
          %s319 = sadd.s32 %s25, 1
          %s320 = smul.u32 %s319, 4
          %s321 = smul.u32 2, %s320
        $region48: #{fire_forward.1} parent=39 // pred_fallthru
          _
      $region40: #{fire_forward.1} parent=5 // pred_fallthru
        _
      %p322 = scmp.le.s32.totalorder 1, %s17
      %p323 = scmp.lt.s32.totalorder %s17, 3
      %p324 = pnand %p322, %p323
      %p325 = pneg %p324
      // Predicated region
      $region49: #{fire_forward.1} parent=5 // pred_check
        _
      $region50: #{fire_forward.1} parent=5 // pred_check_branch
        %327 = sbr.rel (%p324) target = $region52
      $region51: #{fire_forward.1} parent=5 // pred_region
        %s328 = ssub.s32 %s17, 1
        %s329 = smul.u32 8, %s27
        %s330 = ssub.s32 10, %s329
        %p331 = scmp.lt.s32.totalorder %s330, 8
        %s332 = scalar_select %p331, %s330, 8
        %s333 = smul.u32 64, %s332
        %s334 = smul.u32 %s333, 2
        %p335 = scmp.lt.s32.totalorder %s26, 1
        %s336 = scalar_select %p335, %s26, 1
        %p337 = scmp.lt.s32.totalorder %s329, 9
        %s338 = scalar_select %p337, %s329, 9
        %s339 = smul.addr %s338, 2
        %s340 = smul.addr %s336, 20
        %s341 = sadd.s32 %s339, %s340
        %s342 = smul.addr %s341, 4
        %s343 = scalar_lea.vmem %s0, %s342
        %p344 = pneg %p57
        %p345 = pneg %p54
        %s346 = sadd.s32 %s27, 1
        %s347 = smul.u32 %s346, 4
        %s348 = smul.u32 2, %s347
        %p349 = scmp.lt.s32.totalorder %s26, 1
        %s350 = scalar_select %p349, %s26, 1
        %p351 = scmp.lt.s32.totalorder %s348, 9
        %s352 = scalar_select %p351, %s348, 9
        %s353 = smul.addr %s352, 2
        %s354 = smul.addr %s350, 20
        %s355 = sadd.s32 %s353, %s354
        %s356 = smul.addr %s355, 4
        %s357 = scalar_lea.vmem %s1, %s356
        %p358 = pneg %p89
        %p359 = pneg %p86
        %p360 = pneg %p110
        %p361 = pneg %p107
        %p362 = pneg %p131
        %p363 = pneg %p128
        %p364 = pneg %p152
        %p365 = pneg %p149
        %p366 = pneg %p173
        %p367 = pneg %p170
        %p368 = pneg %p194
        %p369 = pneg %p191
        %p370 = pneg %p215
        %p371 = pneg %p212
        %p372 = pneg %p243
        %p373 = pneg %p240
        %s374 = sand.u32 %s230, 1
        %s375 = scalar_lea.sflag [#allocation5], %s374
        %s376 = sand.u32 %s230, 1
        %s377 = smul.addr %s376, 64
        %s378 = scalar_lea.vmem [#allocation4], %s377
        %s379 = smul.u32 8, %s27
        %s380 = ssub.s32 10, %s379
        %p381 = scmp.lt.s32.totalorder %s380, 8
        %s382 = scalar_select %p381, %s380, 8
        %s383 = smul.u32 64, %s382
        %s384 = smul.u32 %s383, 2
        %p385 = scmp.lt.s32.totalorder %s26, 1
        %s386 = scalar_select %p385, %s26, 1
        %p387 = scmp.lt.s32.totalorder %s379, 9
        %s388 = scalar_select %p387, %s379, 9
        %s389 = smul.addr %s388, 2
        %s390 = smul.addr %s386, 20
        %s391 = sadd.s32 %s389, %s390
        %s392 = smul.addr %s391, 4
        %s393 = scalar_lea.vmem %s0, %s392
        %s394 = smul.u32 8, %s27
        %s395 = ssub.s32 10, %s394
        %p396 = scmp.lt.s32.totalorder %s395, 8
        %s397 = scalar_select %p396, %s395, 8
        %s398 = smul.u32 64, %s397
        %s399 = smul.u32 %s398, 2
        %s400 = sadd.s32 %s27, 1
        %s401 = smul.u32 %s400, 4
        %s402 = smul.u32 2, %s401
        %p403 = scmp.lt.s32.totalorder %s26, 1
        %s404 = scalar_select %p403, %s26, 1
        %p405 = scmp.lt.s32.totalorder %s402, 9
        %s406 = scalar_select %p405, %s402, 9
        %s407 = smul.addr %s406, 2
        %s408 = smul.addr %s404, 20
        %s409 = sadd.s32 %s407, %s408
        %s410 = smul.addr %s409, 4
        %s411 = scalar_lea.vmem %s1, %s410
        %s412 = sadd.s32 %s27, 1
        %s413 = smul.u32 %s412, 4
        %s414 = smul.u32 2, %s413
        %s415 = smul.u32 8, %s27
        %v417 = vld [vmem:[%s393] sm:$0xf]
        %v418 = vld [vmem:[%s393 + $0x4] sm:$0xf]
        %v419 = vld [vmem:[%s393 + $0x8] sm:$0xf]
        %v420 = vld [vmem:[%s393 + $0xc] sm:$0xf]
        %v421 = vld [vmem:[%s393 + $0x10] sm:$0xf]
        %v422 = vld [vmem:[%s393 + $0x14] sm:$0xf]
        %v423 = vld [vmem:[%s393 + $0x18] sm:$0xf]
        %v424 = vld [vmem:[%s393 + $0x1c] sm:$0xf]
        %v425 = vld [vmem:[%s393 + $0x20] sm:$0xf]
        %v426 = vld [vmem:[%s393 + $0x24] sm:$0xf]
        %v427 = vld [vmem:[%s393 + $0x28] sm:$0xf]
        %v428 = vld [vmem:[%s393 + $0x2c] sm:$0xf]
        %v429 = vld [vmem:[%s393 + $0x30] sm:$0xf]
        %v430 = vld [vmem:[%s393 + $0x34] sm:$0xf]
        %v431 = vld [vmem:[%s393 + $0x38] sm:$0xf]
        %v432 = vld [vmem:[%s393 + $0x3c] sm:$0xf]
        %v433 = vld [vmem:[%s411] sm:$0xf]
        %v434 = vld [vmem:[%s411 + $0x4] sm:$0xf]
        %v435 = vld [vmem:[%s411 + $0x8] sm:$0xf]
        %v436 = vld [vmem:[%s411 + $0xc] sm:$0xf]
        %v453 = vunpack.c.l.b16 %v417
        %v454 = vunpack.c.l.b16 %v418
        %v455 = vunpack.c.l.b16 %v419
        %v456 = vunpack.c.l.b16 %v420
        %v457 = vunpack.c.l.b16 %v421
        %v458 = vunpack.c.l.b16 %v422
        %v459 = vunpack.c.l.b16 %v423
        %v460 = vunpack.c.l.b16 %v424
        %v461 = vunpack.c.l.b16 %v425
        %v462 = vunpack.c.l.b16 %v426
        %v463 = vunpack.c.l.b16 %v427
        %v464 = vunpack.c.l.b16 %v428
        %v465 = vunpack.c.l.b16 %v429
        %v466 = vunpack.c.l.b16 %v430
        %v467 = vunpack.c.l.b16 %v431
        %v468 = vunpack.c.l.b16 %v432
        %v469 = vpack.c.b16 %v454, %v453
        %v470 = vpack.c.b16 %v456, %v455
        %v471 = vpack.c.b16 %v458, %v457
        %v472 = vpack.c.b16 %v460, %v459
        %v473 = vpack.c.b16 %v462, %v461
        %v474 = vpack.c.b16 %v464, %v463
        %v475 = vpack.c.b16 %v466, %v465
        %v476 = vpack.c.b16 %v468, %v467
        %v481 = vunpack.c.l.b16 %v433
        %v482 = vunpack.c.l.b16 %v434
        %v483 = vunpack.c.l.b16 %v435
        %v484 = vunpack.c.l.b16 %v436
        %v485 = vpack.c.b16 %v482, %v481
        %v486 = vpack.c.b16 %v484, %v483
        %v487 = vld [vmem:[%s2] sm:$0xf]
        %v488 = vld [vmem:[%s2 + $0x4] sm:$0xf]
        %v489 = vld [vmem:[%s2 + $0x8] sm:$0xf]
        %v490 = vld [vmem:[%s2 + $0xc] sm:$0xf]
        %v491 = vld [vmem:[%s2 + $0x10] sm:$0xf]
        %v492 = vld [vmem:[%s2 + $0x14] sm:$0xf]
        %v493 = vld [vmem:[%s2 + $0x18] sm:$0xf]
        %v494 = vld [vmem:[%s2 + $0x1c] sm:$0xf]
        %v503 = vunpack.c.l.b16 %v487
        %v504 = vunpack.c.l.b16 %v488
        %v505 = vunpack.c.l.b16 %v489
        %v506 = vunpack.c.l.b16 %v490
        %v507 = vunpack.c.l.b16 %v491
        %v508 = vunpack.c.l.b16 %v492
        %v509 = vunpack.c.l.b16 %v493
        %v510 = vunpack.c.l.b16 %v494
        %v511 = vpack.c.b16 %v504, %v503
        %v512 = vpack.c.b16 %v506, %v505
        %v513 = vpack.c.b16 %v508, %v507
        %v514 = vpack.c.b16 %v510, %v509
        %vm519 = vcmask 523264
        %v521 = vsel %vm519, %v469, 0
        %v524 = vsel %vm519, %v470, 0
        %v527 = vsel %vm519, %v471, 0
        %v530 = vsel %vm519, %v472, 0
        %v533 = vsel %vm519, %v473, 0
        %v536 = vsel %vm519, %v474, 0
        %v539 = vsel %vm519, %v475, 0
        %v542 = vsel %vm519, %v476, 0
        %v545 = vsel %vm519, %v485, 0
        %v548 = vsel %vm519, %v486, 0
        %550 = vmatprep.subr.bf16.mxu0 0
        %551 = vmatpush1.bf16.msra.mxu0 %v511
        %552 = vmatprep.subr.bf16.mxu0 0
        %553 = vmatpush1.bf16.msra.mxu0 %v512
        %554 = vmatprep.subr.bf16.mxu0 0
        %555 = vmatpush1.bf16.msra.mxu0 %v513
        %556 = vmatprep.subr.bf16.mxu0 0
        %557 = vmatpush1.bf16.msra.mxu0 %v514
        %558 = vmatprep.subr.bf16.mxu0 0
        %559 = vmatpush1.bf16.msra.mxu0 0
        %560 = vmatprep.subr.bf16.mxu0 0
        %561 = vmatpush1.bf16.msra.mxu0 0
        %562 = vmatprep.subr.bf16.mxu0 0
        %563 = vmatpush1.bf16.msra.mxu0 0
        %564 = vmatprep.subr.bf16.mxu0 0
        %565 = vmatpush1.bf16.msra.mxu0 0
        %566 = vmatprep.subr.bf16.mxu0 0
        %567 = vmatpush1.bf16.msra.mxu0 0
        %568 = vmatprep.subr.bf16.mxu0 0
        %569 = vmatpush1.bf16.msra.mxu0 0
        %570 = vmatprep.subr.bf16.mxu0 0
        %571 = vmatpush1.bf16.msra.mxu0 0
        %572 = vmatprep.subr.bf16.mxu0 0
        %573 = vmatpush1.bf16.msra.mxu0 0
        %574 = vmatprep.subr.bf16.mxu0 0
        %575 = vmatpush1.bf16.msra.mxu0 0
        %576 = vmatprep.subr.bf16.mxu0 0
        %577 = vmatpush1.bf16.msra.mxu0 0
        %578 = vmatprep.subr.bf16.mxu0 0
        %579 = vmatpush1.bf16.msra.mxu0 0
        %580 = vmatprep.subr.bf16.mxu0 0
        %581 = vmatpush1.bf16.msra.mxu0 0
        %582 = vmatprep.mubr.bf16.mxu0 0
        %583 = vmatmul.mubr.bf16.gmra.mrb[0].mxu0 %v521
        %v584 = vpop.f32.mrb[0].mxu0
        %v585 = vadd.f32 0.0, %v584
        %v586 = vpop.f32.mrb[0].mxu0
        %v587 = vpop.f32.mrb[0].mxu0
        %v588 = vadd.f32 0.0, %v587
        %v589 = vpop.f32.mrb[0].mxu0
        %590 = vmatprep.mubr.bf16.mxu0 0
        %591 = vmatmul.mubr.bf16.gmra.mrb[0].mxu0 %v524
        %v592 = vpop.f32.mrb[0].mxu0
        %v593 = vadd.f32 0.0, %v592
        %v594 = vpop.f32.mrb[0].mxu0
        %v595 = vpop.f32.mrb[0].mxu0
        %v596 = vadd.f32 0.0, %v595
        %v597 = vpop.f32.mrb[0].mxu0
        %598 = vmatprep.mubr.bf16.mxu0 0
        %599 = vmatmul.mubr.bf16.gmra.mrb[0].mxu0 %v527
        %v600 = vpop.f32.mrb[0].mxu0
        %v601 = vadd.f32 0.0, %v600
        %v602 = vpop.f32.mrb[0].mxu0
        %v603 = vpop.f32.mrb[0].mxu0
        %v604 = vadd.f32 0.0, %v603
        %v605 = vpop.f32.mrb[0].mxu0
        %606 = vmatprep.mubr.bf16.mxu0 0
        %607 = vmatmul.mubr.bf16.gmra.mrb[0].mxu0 %v530
        %v608 = vpop.f32.mrb[0].mxu0
        %v609 = vadd.f32 0.0, %v608
        %v610 = vpop.f32.mrb[0].mxu0
        %v611 = vpop.f32.mrb[0].mxu0
        %v612 = vadd.f32 0.0, %v611
        %v613 = vpop.f32.mrb[0].mxu0
        %614 = vmatprep.mubr.bf16.mxu0 0
        %615 = vmatmul.mubr.bf16.gmra.mrb[0].mxu0 %v533
        %v616 = vpop.f32.mrb[0].mxu0
        %v617 = vadd.f32 0.0, %v616
        %v618 = vpop.f32.mrb[0].mxu0
        %v619 = vpop.f32.mrb[0].mxu0
        %v620 = vadd.f32 0.0, %v619
        %v621 = vpop.f32.mrb[0].mxu0
        %622 = vmatprep.mubr.bf16.mxu0 0
        %623 = vmatmul.mubr.bf16.gmra.mrb[0].mxu0 %v536
        %v624 = vpop.f32.mrb[0].mxu0
        %v625 = vadd.f32 0.0, %v624
        %v626 = vpop.f32.mrb[0].mxu0
        %v627 = vpop.f32.mrb[0].mxu0
        %v628 = vadd.f32 0.0, %v627
        %v629 = vpop.f32.mrb[0].mxu0
        %630 = vmatprep.mubr.bf16.mxu0 0
        %631 = vmatmul.mubr.bf16.gmra.mrb[0].mxu0 %v539
        %v632 = vpop.f32.mrb[0].mxu0
        %v633 = vadd.f32 0.0, %v632
        %v634 = vpop.f32.mrb[0].mxu0
        %v635 = vpop.f32.mrb[0].mxu0
        %v636 = vadd.f32 0.0, %v635
        %v637 = vpop.f32.mrb[0].mxu0
        %638 = vmatprep.mubr.bf16.mxu0 0
        %639 = vmatmul.mubr.bf16.gmra.mrb[0].mxu0 %v542
        %v640 = vpop.f32.mrb[0].mxu0
        %v641 = vadd.f32 0.0, %v640
        %v642 = vpop.f32.mrb[0].mxu0
        %v643 = vpop.f32.mrb[0].mxu0
        %v644 = vadd.f32 0.0, %v643
        %v645 = vpop.f32.mrb[0].mxu0
        %646 = vmatprep.mubr.bf16.mxu0 0
        %647 = vmatmul.mubr.bf16.gmra.mrb[0].mxu0 %v545
        %v648 = vpop.f32.mrb[0].mxu0
        %v649 = vadd.f32 0.0, %v648
        %v650 = vpop.f32.mrb[0].mxu0
        %v651 = vpop.f32.mrb[0].mxu0
        %v652 = vadd.f32 0.0, %v651
        %v653 = vpop.f32.mrb[0].mxu0
        %654 = vmatprep.mubr.bf16.mxu0 0
        %655 = vmatmul.mubr.bf16.gmra.mrb[0].mxu0 %v548
        %v656 = vpop.f32.mrb[0].mxu0
        %v657 = vadd.f32 0.0, %v656
        %v658 = vpop.f32.mrb[0].mxu0
        %v659 = vpop.f32.mrb[0].mxu0
        %v660 = vadd.f32 0.0, %v659
        %v661 = vpop.f32.mrb[0].mxu0
        %662 = vdwg.mxu0
        %v663 = vld [vmem:[%s3] sm:$0x1]
        %v665 = vlaneseq
        %v666 = vshrl.u32 %v665, 7
        %v667 = vsub.s32 0, %v666
        %v668 = vrot.slane %v663, %v667
        %v670 = vmul.f32 %v585, %v668
        %v671 = vmul.f32 %v588, %v668
        %v672 = vmul.f32 %v593, %v668
        %v673 = vmul.f32 %v596, %v668
        %v674 = vmul.f32 %v601, %v668
        %v675 = vmul.f32 %v604, %v668
        %v676 = vmul.f32 %v609, %v668
        %v677 = vmul.f32 %v612, %v668
        %v678 = vmul.f32 %v617, %v668
        %v679 = vmul.f32 %v620, %v668
        %v680 = vmul.f32 %v625, %v668
        %v681 = vmul.f32 %v628, %v668
        %v682 = vmul.f32 %v633, %v668
        %v683 = vmul.f32 %v636, %v668
        %v684 = vmul.f32 %v641, %v668
        %v685 = vmul.f32 %v644, %v668
        %v686 = vmul.f32 %v649, %v668
        %v687 = vmul.f32 %v652, %v668
        %v688 = vmul.f32 %v657, %v668
        %v689 = vmul.f32 %v660, %v668
        %v690 = vld [vmem:[%s4] sm:$0x1]
        %v692 = vlaneseq
        %v693 = vshrl.u32 %v692, 7
        %v694 = vsub.s32 0, %v693
        %v695 = vrot.slane %v690, %v694
        %v697 = vadd.f32 %v670, %v695
        %v698 = vadd.f32 %v671, %v695
        %v699 = vadd.f32 %v672, %v695
        %v700 = vadd.f32 %v673, %v695
        %v701 = vadd.f32 %v674, %v695
        %v702 = vadd.f32 %v675, %v695
        %v703 = vadd.f32 %v676, %v695
        %v704 = vadd.f32 %v677, %v695
        %v705 = vadd.f32 %v678, %v695
        %v706 = vadd.f32 %v679, %v695
        %v707 = vadd.f32 %v680, %v695
        %v708 = vadd.f32 %v681, %v695
        %v709 = vadd.f32 %v682, %v695
        %v710 = vadd.f32 %v683, %v695
        %v711 = vadd.f32 %v684, %v695
        %v712 = vadd.f32 %v685, %v695
        %v713 = vadd.f32 %v686, %v695
        %v714 = vadd.f32 %v687, %v695
        %v715 = vadd.f32 %v688, %v695
        %v716 = vadd.f32 %v689, %v695
        %v717 = vmax.f32 %v697, 0.0
        %v718 = vmax.f32 %v698, 0.0
        %v719 = vmax.f32 %v699, 0.0
        %v720 = vmax.f32 %v700, 0.0
        %v721 = vmax.f32 %v701, 0.0
        %v722 = vmax.f32 %v702, 0.0
        %v723 = vmax.f32 %v703, 0.0
        %v724 = vmax.f32 %v704, 0.0
        %v725 = vmax.f32 %v705, 0.0
        %v726 = vmax.f32 %v706, 0.0
        %v727 = vmax.f32 %v707, 0.0
        %v728 = vmax.f32 %v708, 0.0
        %v729 = vmax.f32 %v709, 0.0
        %v730 = vmax.f32 %v710, 0.0
        %v731 = vmax.f32 %v711, 0.0
        %v732 = vmax.f32 %v712, 0.0
        %v733 = vmax.f32 %v713, 0.0
        %v734 = vmax.f32 %v714, 0.0
        %v735 = vmax.f32 %v715, 0.0
        %v736 = vmax.f32 %v716, 0.0
        %s737 = smul.u32 %s27, 8
        %v738 = vstv %s737
        %v739 = vadd.s32 %v738, 1
        %v740 = vadd.s32 %v738, 2
        %v741 = vadd.s32 %v738, 3
        %v742 = vadd.s32 %v738, 4
        %v743 = vadd.s32 %v738, 5
        %v744 = vadd.s32 %v738, 6
        %v745 = vadd.s32 %v738, 7
        %v746 = vadd.s32 %v738, 8
        %v747 = vadd.s32 %v738, 9
        %vm748 = vcmp.ge.s32.totalorder %v738, 1
        %vm749 = vcmp.ge.s32.totalorder %v739, 1
        %vm750 = vcmp.ge.s32.totalorder %v740, 1
        %vm751 = vcmp.ge.s32.totalorder %v741, 1
        %vm752 = vcmp.ge.s32.totalorder %v742, 1
        %vm753 = vcmp.ge.s32.totalorder %v743, 1
        %vm754 = vcmp.ge.s32.totalorder %v744, 1
        %vm755 = vcmp.ge.s32.totalorder %v745, 1
        %vm756 = vcmp.ge.s32.totalorder %v746, 1
        %vm757 = vcmp.ge.s32.totalorder %v747, 1
        %vm758 = vcmp.le.s32.totalorder %v738, 8
        %vm759 = vcmp.le.s32.totalorder %v739, 8
        %vm760 = vcmp.le.s32.totalorder %v740, 8
        %vm761 = vcmp.le.s32.totalorder %v741, 8
        %vm762 = vcmp.le.s32.totalorder %v742, 8
        %vm763 = vcmp.le.s32.totalorder %v743, 8
        %vm764 = vcmp.le.s32.totalorder %v744, 8
        %vm765 = vcmp.le.s32.totalorder %v745, 8
        %vm766 = vcmp.le.s32.totalorder %v746, 8
        %vm767 = vcmp.le.s32.totalorder %v747, 8
        %vm768 = vmand %vm748, %vm758
        %vm769 = vmand %vm749, %vm759
        %vm770 = vmand %vm750, %vm760
        %vm771 = vmand %vm751, %vm761
        %vm772 = vmand %vm752, %vm762
        %vm773 = vmand %vm753, %vm763
        %vm774 = vmand %vm754, %vm764
        %vm775 = vmand %vm755, %vm765
        %vm776 = vmand %vm756, %vm766
        %vm777 = vmand %vm757, %vm767
        %v778 = vsel %vm768, 1, 0
        %v779 = vsel %vm769, 1, 0
        %v780 = vsel %vm770, 1, 0
        %v781 = vsel %vm771, 1, 0
        %v782 = vsel %vm772, 1, 0
        %v783 = vsel %vm773, 1, 0
        %v784 = vsel %vm774, 1, 0
        %v785 = vsel %vm775, 1, 0
        %v786 = vsel %vm776, 1, 0
        %v787 = vsel %vm777, 1, 0
        %vm788 = vcmp.eq.s32.totalorder %v778, 1
        %vm789 = vcmp.eq.s32.totalorder %v779, 1
        %vm790 = vcmp.eq.s32.totalorder %v780, 1
        %vm791 = vcmp.eq.s32.totalorder %v781, 1
        %vm792 = vcmp.eq.s32.totalorder %v782, 1
        %vm793 = vcmp.eq.s32.totalorder %v783, 1
        %vm794 = vcmp.eq.s32.totalorder %v784, 1
        %vm795 = vcmp.eq.s32.totalorder %v785, 1
        %vm796 = vcmp.eq.s32.totalorder %v786, 1
        %vm797 = vcmp.eq.s32.totalorder %v787, 1
        %v798 = vsel %vm788, %v717, 0.0
        %v799 = vsel %vm788, %v718, 0.0
        %v800 = vsel %vm789, %v719, 0.0
        %v801 = vsel %vm789, %v720, 0.0
        %v802 = vsel %vm790, %v721, 0.0
        %v803 = vsel %vm790, %v722, 0.0
        %v804 = vsel %vm791, %v723, 0.0
        %v805 = vsel %vm791, %v724, 0.0
        %v806 = vsel %vm792, %v725, 0.0
        %v807 = vsel %vm792, %v726, 0.0
        %v808 = vsel %vm793, %v727, 0.0
        %v809 = vsel %vm793, %v728, 0.0
        %v810 = vsel %vm794, %v729, 0.0
        %v811 = vsel %vm794, %v730, 0.0
        %v812 = vsel %vm795, %v731, 0.0
        %v813 = vsel %vm795, %v732, 0.0
        %v814 = vsel %vm796, %v733, 0.0
        %v815 = vsel %vm796, %v734, 0.0
        %v816 = vsel %vm797, %v735, 0.0
        %v817 = vsel %vm797, %v736, 0.0
        %vm818 = vcmask 122880
        %vm819 = vsmask.f32 256
        %vm820 = vmand %vm818, %vm819
        %v821 = vld [vmem:[#allocation2] sm:$0x1]
        %v822 = vsel %vm820, 0, %v821
        %823 = vst [vmem:[#allocation2] sm:$0x1] %v822
        %v824 = vld [vmem:[#allocation2 + $0xc] sm:$0x1]
        %v825 = vsel %vm820, 0, %v824
        %826 = vst [vmem:[#allocation2 + $0xc] sm:$0x1] %v825
        %v827 = vld [vmem:[#allocation2 + $0x18] sm:$0x1]
        %v828 = vsel %vm820, 0, %v827
        %829 = vst [vmem:[#allocation2 + $0x18] sm:$0x1] %v828
        %v830 = vld [vmem:[#allocation2 + $0x24] sm:$0x1]
        %v831 = vsel %vm820, 0, %v830
        %832 = vst [vmem:[#allocation2 + $0x24] sm:$0x1] %v831
        %v833 = vld [vmem:[#allocation2 + $0x30] sm:$0x1]
        %v834 = vsel %vm820, 0, %v833
        %835 = vst [vmem:[#allocation2 + $0x30] sm:$0x1] %v834
        %v836 = vld [vmem:[#allocation2 + $0x3c] sm:$0x1]
        %v837 = vsel %vm820, 0, %v836
        %838 = vst [vmem:[#allocation2 + $0x3c] sm:$0x1] %v837
        %v839 = vld [vmem:[#allocation2 + $0x48] sm:$0x1]
        %v840 = vsel %vm820, 0, %v839
        %841 = vst [vmem:[#allocation2 + $0x48] sm:$0x1] %v840
        %v842 = vld [vmem:[#allocation2 + $0x54] sm:$0x1]
        %v843 = vsel %vm820, 0, %v842
        %844 = vst [vmem:[#allocation2 + $0x54] sm:$0x1] %v843
        %v845 = vld [vmem:[#allocation2 + $0x60] sm:$0x1]
        %v846 = vsel %vm820, 0, %v845
        %847 = vst [vmem:[#allocation2 + $0x60] sm:$0x1] %v846
        %v848 = vld [vmem:[#allocation2 + $0x6c] sm:$0x1]
        %v849 = vsel %vm820, 0, %v848
        %850 = vst [vmem:[#allocation2 + $0x6c] sm:$0x1] %v849
        %vm851 = vsmask.f32 7938
        %vm852 = vmand %vm818, %vm851
        %v853 = vld [vmem:[#allocation2 + $0x8] sm:$0x1]
        %v854 = vsel %vm852, 0, %v853
        %855 = vst [vmem:[#allocation2 + $0x8] sm:$0x1] %v854
        %v856 = vld [vmem:[#allocation2 + $0x14] sm:$0x1]
        %v857 = vsel %vm852, 0, %v856
        %858 = vst [vmem:[#allocation2 + $0x14] sm:$0x1] %v857
        %v859 = vld [vmem:[#allocation2 + $0x20] sm:$0x1]
        %v860 = vsel %vm852, 0, %v859
        %861 = vst [vmem:[#allocation2 + $0x20] sm:$0x1] %v860
        %v862 = vld [vmem:[#allocation2 + $0x2c] sm:$0x1]
        %v863 = vsel %vm852, 0, %v862
        %864 = vst [vmem:[#allocation2 + $0x2c] sm:$0x1] %v863
        %v865 = vld [vmem:[#allocation2 + $0x38] sm:$0x1]
        %v866 = vsel %vm852, 0, %v865
        %867 = vst [vmem:[#allocation2 + $0x38] sm:$0x1] %v866
        %v868 = vld [vmem:[#allocation2 + $0x44] sm:$0x1]
        %v869 = vsel %vm852, 0, %v868
        %870 = vst [vmem:[#allocation2 + $0x44] sm:$0x1] %v869
        %v871 = vld [vmem:[#allocation2 + $0x50] sm:$0x1]
        %v872 = vsel %vm852, 0, %v871
        %873 = vst [vmem:[#allocation2 + $0x50] sm:$0x1] %v872
        %v874 = vld [vmem:[#allocation2 + $0x5c] sm:$0x1]
        %v875 = vsel %vm852, 0, %v874
        %876 = vst [vmem:[#allocation2 + $0x5c] sm:$0x1] %v875
        %v877 = vld [vmem:[#allocation2 + $0x68] sm:$0x1]
        %v878 = vsel %vm852, 0, %v877
        %879 = vst [vmem:[#allocation2 + $0x68] sm:$0x1] %v878
        %v880 = vld [vmem:[#allocation2 + $0x74] sm:$0x1]
        %v881 = vsel %vm852, 0, %v880
        %882 = vst [vmem:[#allocation2 + $0x74] sm:$0x1] %v881
        %v883 = vpack.c.bf16 %v799, %v798
        %v884 = vpack.c.bf16 %v801, %v800
        %v885 = vpack.c.bf16 %v803, %v802
        %v886 = vpack.c.bf16 %v805, %v804
        %v887 = vpack.c.bf16 %v807, %v806
        %v888 = vpack.c.bf16 %v809, %v808
        %v889 = vpack.c.bf16 %v811, %v810
        %v890 = vpack.c.bf16 %v813, %v812
        %v891 = vpack.c.bf16 %v815, %v814
        %v892 = vpack.c.bf16 %v817, %v816
        %v903 = vunpack.c.l.b16 %v883
        %v904 = vunpack.c.h.b16 %v883
        %v905 = vunpack.c.l.b16 %v884
        %v906 = vunpack.c.h.b16 %v884
        %v907 = vunpack.c.l.b16 %v885
        %v908 = vunpack.c.h.b16 %v885
        %v909 = vunpack.c.l.b16 %v886
        %v910 = vunpack.c.h.b16 %v886
        %v911 = vunpack.c.l.b16 %v887
        %v912 = vunpack.c.h.b16 %v887
        %v913 = vunpack.c.l.b16 %v888
        %v914 = vunpack.c.h.b16 %v888
        %v915 = vunpack.c.l.b16 %v889
        %v916 = vunpack.c.h.b16 %v889
        %v917 = vunpack.c.l.b16 %v890
        %v918 = vunpack.c.h.b16 %v890
        %v919 = vunpack.c.l.b16 %v891
        %v920 = vunpack.c.h.b16 %v891
        %v921 = vunpack.c.l.b16 %v892
        %v922 = vunpack.c.h.b16 %v892
        %v923 = vpack.c.b16 %v903, %v903
        %v924 = vpack.c.b16 %v904, %v904
        %v925 = vpack.c.b16 %v905, %v905
        %v926 = vpack.c.b16 %v906, %v906
        %v927 = vpack.c.b16 %v907, %v907
        %v928 = vpack.c.b16 %v908, %v908
        %v929 = vpack.c.b16 %v909, %v909
        %v930 = vpack.c.b16 %v910, %v910
        %v931 = vpack.c.b16 %v911, %v911
        %v932 = vpack.c.b16 %v912, %v912
        %v933 = vpack.c.b16 %v913, %v913
        %v934 = vpack.c.b16 %v914, %v914
        %v935 = vpack.c.b16 %v915, %v915
        %v936 = vpack.c.b16 %v916, %v916
        %v937 = vpack.c.b16 %v917, %v917
        %v938 = vpack.c.b16 %v918, %v918
        %v939 = vpack.c.b16 %v919, %v919
        %v940 = vpack.c.b16 %v920, %v920
        %v941 = vpack.c.b16 %v921, %v921
        %v942 = vpack.c.b16 %v922, %v922
        %vm943 = vsmask.f32 4368
        %vm944 = vmor %vm819, %vm943
        %v946 = vshrl.u32 %v923, 16
        %v948 = vrot.slane %v946, 7
        %v949 = vshll.u32 %v923, 16
        %v951 = vor.u32 %v948, %v949
        %v952 = vrot.slane %v948, 4
        %v954 = vshrl.u32 %v924, 16
        %v956 = vrot.slane %v954, 7
        %v957 = vshll.u32 %v924, 16
        %v959 = vor.u32 %v956, %v957
        %v960 = vsel %vm944, %v952, %v959
        %v961 = vrot.slane %v956, 4
        %v963 = vshrl.u32 %v925, 16
        %v965 = vrot.slane %v963, 7
        %v966 = vshll.u32 %v925, 16
        %v968 = vor.u32 %v965, %v966
        %v969 = vrot.slane %v965, 4
        %v971 = vshrl.u32 %v926, 16
        %v973 = vrot.slane %v971, 7
        %v974 = vshll.u32 %v926, 16
        %v976 = vor.u32 %v973, %v974
        %v977 = vsel %vm944, %v969, %v976
        %v978 = vrot.slane %v973, 4
        %v980 = vshrl.u32 %v927, 16
        %v982 = vrot.slane %v980, 7
        %v983 = vshll.u32 %v927, 16
        %v985 = vor.u32 %v982, %v983
        %v986 = vrot.slane %v982, 4
        %v988 = vshrl.u32 %v928, 16
        %v990 = vrot.slane %v988, 7
        %v991 = vshll.u32 %v928, 16
        %v993 = vor.u32 %v990, %v991
        %v994 = vsel %vm944, %v986, %v993
        %v995 = vrot.slane %v990, 4
        %v997 = vshrl.u32 %v929, 16
        %v999 = vrot.slane %v997, 7
        %v1000 = vshll.u32 %v929, 16
        %v1002 = vor.u32 %v999, %v1000
        %v1003 = vrot.slane %v999, 4
        %v1005 = vshrl.u32 %v930, 16
        %v1007 = vrot.slane %v1005, 7
        %v1008 = vshll.u32 %v930, 16
        %v1010 = vor.u32 %v1007, %v1008
        %v1011 = vsel %vm944, %v1003, %v1010
        %v1012 = vrot.slane %v1007, 4
        %v1014 = vshrl.u32 %v931, 16
        %v1016 = vrot.slane %v1014, 7
        %v1017 = vshll.u32 %v931, 16
        %v1019 = vor.u32 %v1016, %v1017
        %v1020 = vrot.slane %v1016, 4
        %v1022 = vshrl.u32 %v932, 16
        %v1024 = vrot.slane %v1022, 7
        %v1025 = vshll.u32 %v932, 16
        %v1027 = vor.u32 %v1024, %v1025
        %v1028 = vsel %vm944, %v1020, %v1027
        %v1029 = vrot.slane %v1024, 4
        %v1031 = vshrl.u32 %v933, 16
        %v1033 = vrot.slane %v1031, 7
        %v1034 = vshll.u32 %v933, 16
        %v1036 = vor.u32 %v1033, %v1034
        %v1037 = vrot.slane %v1033, 4
        %v1039 = vshrl.u32 %v934, 16
        %v1041 = vrot.slane %v1039, 7
        %v1042 = vshll.u32 %v934, 16
        %v1044 = vor.u32 %v1041, %v1042
        %v1045 = vsel %vm944, %v1037, %v1044
        %v1046 = vrot.slane %v1041, 4
        %v1048 = vshrl.u32 %v935, 16
        %v1050 = vrot.slane %v1048, 7
        %v1051 = vshll.u32 %v935, 16
        %v1053 = vor.u32 %v1050, %v1051
        %v1054 = vrot.slane %v1050, 4
        %v1056 = vshrl.u32 %v936, 16
        %v1058 = vrot.slane %v1056, 7
        %v1059 = vshll.u32 %v936, 16
        %v1061 = vor.u32 %v1058, %v1059
        %v1062 = vsel %vm944, %v1054, %v1061
        %v1063 = vrot.slane %v1058, 4
        %v1065 = vshrl.u32 %v937, 16
        %v1067 = vrot.slane %v1065, 7
        %v1068 = vshll.u32 %v937, 16
        %v1070 = vor.u32 %v1067, %v1068
        %v1071 = vrot.slane %v1067, 4
        %v1073 = vshrl.u32 %v938, 16
        %v1075 = vrot.slane %v1073, 7
        %v1076 = vshll.u32 %v938, 16
        %v1078 = vor.u32 %v1075, %v1076
        %v1079 = vsel %vm944, %v1071, %v1078
        %v1080 = vrot.slane %v1075, 4
        %v1082 = vshrl.u32 %v939, 16
        %v1084 = vrot.slane %v1082, 7
        %v1085 = vshll.u32 %v939, 16
        %v1087 = vor.u32 %v1084, %v1085
        %v1088 = vrot.slane %v1084, 4
        %v1090 = vshrl.u32 %v940, 16
        %v1092 = vrot.slane %v1090, 7
        %v1093 = vshll.u32 %v940, 16
        %v1095 = vor.u32 %v1092, %v1093
        %v1096 = vsel %vm944, %v1088, %v1095
        %v1097 = vrot.slane %v1092, 4
        %v1099 = vshrl.u32 %v941, 16
        %v1101 = vrot.slane %v1099, 7
        %v1102 = vshll.u32 %v941, 16
        %v1104 = vor.u32 %v1101, %v1102
        %v1105 = vrot.slane %v1101, 4
        %v1107 = vshrl.u32 %v942, 16
        %v1109 = vrot.slane %v1107, 7
        %v1110 = vshll.u32 %v942, 16
        %v1112 = vor.u32 %v1109, %v1110
        %v1113 = vsel %vm944, %v1105, %v1112
        %v1114 = vrot.slane %v1109, 4
        %vm1145 = vcmask 125952
        %vm1146 = vmand %vm1145, %vm851
        %v1147 = vld [vmem:[#allocation2] sm:$0xf]
        %v1148 = vsel %vm1146, %v951, %v1147
        %1149 = vst [vmem:[#allocation2] sm:$0xf] %v1148
        %vm1150 = vcmask 125952
        %1151 = vst.msk [vmem:[#allocation2 + $0x4] sm:$0xf] %vm1150, %v960
        %v1152 = vld [vmem:[#allocation2 + $0x8] sm:$0x1]
        %v1153 = vsel %vm820, %v961, %v1152
        %1154 = vst [vmem:[#allocation2 + $0x8] sm:$0x1] %v1153
        %v1155 = vld [vmem:[#allocation2 + $0xc] sm:$0xf]
        %v1156 = vsel %vm1146, %v968, %v1155
        %1157 = vst [vmem:[#allocation2 + $0xc] sm:$0xf] %v1156
        %1158 = vst.msk [vmem:[#allocation2 + $0x10] sm:$0xf] %vm1150, %v977
        %v1159 = vld [vmem:[#allocation2 + $0x14] sm:$0x1]
        %v1160 = vsel %vm820, %v978, %v1159
        %1161 = vst [vmem:[#allocation2 + $0x14] sm:$0x1] %v1160
        %v1162 = vld [vmem:[#allocation2 + $0x18] sm:$0xf]
        %v1163 = vsel %vm1146, %v985, %v1162
        %1164 = vst [vmem:[#allocation2 + $0x18] sm:$0xf] %v1163
        %1165 = vst.msk [vmem:[#allocation2 + $0x1c] sm:$0xf] %vm1150, %v994
        %v1166 = vld [vmem:[#allocation2 + $0x20] sm:$0x1]
        %v1167 = vsel %vm820, %v995, %v1166
        %1168 = vst [vmem:[#allocation2 + $0x20] sm:$0x1] %v1167
        %v1169 = vld [vmem:[#allocation2 + $0x24] sm:$0xf]
        %v1170 = vsel %vm1146, %v1002, %v1169
        %1171 = vst [vmem:[#allocation2 + $0x24] sm:$0xf] %v1170
        %1172 = vst.msk [vmem:[#allocation2 + $0x28] sm:$0xf] %vm1150, %v1011
        %v1173 = vld [vmem:[#allocation2 + $0x2c] sm:$0x1]
        %v1174 = vsel %vm820, %v1012, %v1173
        %1175 = vst [vmem:[#allocation2 + $0x2c] sm:$0x1] %v1174
        %v1176 = vld [vmem:[#allocation2 + $0x30] sm:$0xf]
        %v1177 = vsel %vm1146, %v1019, %v1176
        %1178 = vst [vmem:[#allocation2 + $0x30] sm:$0xf] %v1177
        %1179 = vst.msk [vmem:[#allocation2 + $0x34] sm:$0xf] %vm1150, %v1028
        %v1180 = vld [vmem:[#allocation2 + $0x38] sm:$0x1]
        %v1181 = vsel %vm820, %v1029, %v1180
        %1182 = vst [vmem:[#allocation2 + $0x38] sm:$0x1] %v1181
        %v1183 = vld [vmem:[#allocation2 + $0x3c] sm:$0xf]
        %v1184 = vsel %vm1146, %v1036, %v1183
        %1185 = vst [vmem:[#allocation2 + $0x3c] sm:$0xf] %v1184
        %1186 = vst.msk [vmem:[#allocation2 + $0x40] sm:$0xf] %vm1150, %v1045
        %v1187 = vld [vmem:[#allocation2 + $0x44] sm:$0x1]
        %v1188 = vsel %vm820, %v1046, %v1187
        %1189 = vst [vmem:[#allocation2 + $0x44] sm:$0x1] %v1188
        %v1190 = vld [vmem:[#allocation2 + $0x48] sm:$0xf]
        %v1191 = vsel %vm1146, %v1053, %v1190
        %1192 = vst [vmem:[#allocation2 + $0x48] sm:$0xf] %v1191
        %1193 = vst.msk [vmem:[#allocation2 + $0x4c] sm:$0xf] %vm1150, %v1062
        %v1194 = vld [vmem:[#allocation2 + $0x50] sm:$0x1]
        %v1195 = vsel %vm820, %v1063, %v1194
        %1196 = vst [vmem:[#allocation2 + $0x50] sm:$0x1] %v1195
        %v1197 = vld [vmem:[#allocation2 + $0x54] sm:$0xf]
        %v1198 = vsel %vm1146, %v1070, %v1197
        %1199 = vst [vmem:[#allocation2 + $0x54] sm:$0xf] %v1198
        %1200 = vst.msk [vmem:[#allocation2 + $0x58] sm:$0xf] %vm1150, %v1079
        %v1201 = vld [vmem:[#allocation2 + $0x5c] sm:$0x1]
        %v1202 = vsel %vm820, %v1080, %v1201
        %1203 = vst [vmem:[#allocation2 + $0x5c] sm:$0x1] %v1202
        %v1204 = vld [vmem:[#allocation2 + $0x60] sm:$0xf]
        %v1205 = vsel %vm1146, %v1087, %v1204
        %1206 = vst [vmem:[#allocation2 + $0x60] sm:$0xf] %v1205
        %1207 = vst.msk [vmem:[#allocation2 + $0x64] sm:$0xf] %vm1150, %v1096
        %v1208 = vld [vmem:[#allocation2 + $0x68] sm:$0x1]
        %v1209 = vsel %vm820, %v1097, %v1208
        %1210 = vst [vmem:[#allocation2 + $0x68] sm:$0x1] %v1209
        %v1211 = vld [vmem:[#allocation2 + $0x6c] sm:$0xf]
        %v1212 = vsel %vm1146, %v1104, %v1211
        %1213 = vst [vmem:[#allocation2 + $0x6c] sm:$0xf] %v1212
        %1214 = vst.msk [vmem:[#allocation2 + $0x70] sm:$0xf] %vm1150, %v1113
        %v1215 = vld [vmem:[#allocation2 + $0x74] sm:$0x1]
        %v1216 = vsel %vm820, %v1114, %v1215
        %1217 = vst [vmem:[#allocation2 + $0x74] sm:$0x1] %v1216
        %v1218 = vld [vmem:[#allocation2] sm:$0xf]
        %v1219 = vld [vmem:[#allocation2 + $0x4] sm:$0xf]
        %v1220 = vld [vmem:[#allocation2 + $0xc] sm:$0xf]
        %v1221 = vld [vmem:[#allocation2 + $0x10] sm:$0xf]
        %v1222 = vld [vmem:[#allocation2 + $0x18] sm:$0xf]
        %v1223 = vld [vmem:[#allocation2 + $0x1c] sm:$0xf]
        %v1224 = vld [vmem:[#allocation2 + $0x24] sm:$0xf]
        %v1225 = vld [vmem:[#allocation2 + $0x28] sm:$0xf]
        %v1226 = vld [vmem:[#allocation2 + $0x30] sm:$0xf]
        %v1227 = vld [vmem:[#allocation2 + $0x34] sm:$0xf]
        %v1228 = vld [vmem:[#allocation2 + $0x3c] sm:$0xf]
        %v1229 = vld [vmem:[#allocation2 + $0x40] sm:$0xf]
        %v1230 = vld [vmem:[#allocation2 + $0x48] sm:$0xf]
        %v1231 = vld [vmem:[#allocation2 + $0x4c] sm:$0xf]
        %v1232 = vld [vmem:[#allocation2 + $0x54] sm:$0xf]
        %v1233 = vld [vmem:[#allocation2 + $0x58] sm:$0xf]
        %v1250 = vunpack.c.l.b16 %v1218
        %v1251 = vunpack.c.l.b16 %v1219
        %v1252 = vunpack.c.l.b16 %v1220
        %v1253 = vunpack.c.l.b16 %v1221
        %v1254 = vunpack.c.l.b16 %v1222
        %v1255 = vunpack.c.l.b16 %v1223
        %v1256 = vunpack.c.l.b16 %v1224
        %v1257 = vunpack.c.l.b16 %v1225
        %v1258 = vunpack.c.l.b16 %v1226
        %v1259 = vunpack.c.l.b16 %v1227
        %v1260 = vunpack.c.l.b16 %v1228
        %v1261 = vunpack.c.l.b16 %v1229
        %v1262 = vunpack.c.l.b16 %v1230
        %v1263 = vunpack.c.l.b16 %v1231
        %v1264 = vunpack.c.l.b16 %v1232
        %v1265 = vunpack.c.l.b16 %v1233
        %v1266 = vpack.c.b16 %v1251, %v1250
        %v1267 = vpack.c.b16 %v1253, %v1252
        %v1268 = vpack.c.b16 %v1255, %v1254
        %v1269 = vpack.c.b16 %v1257, %v1256
        %v1270 = vpack.c.b16 %v1259, %v1258
        %v1271 = vpack.c.b16 %v1261, %v1260
        %v1272 = vpack.c.b16 %v1263, %v1262
        %v1273 = vpack.c.b16 %v1265, %v1264
        %vm1282 = vcmask 130048
        %1283 = vst.msk [vmem:[#allocation3] sm:$0xff] %vm1282, %v1266
        %1284 = vst.msk [vmem:[#allocation3 + $0x10] sm:$0xff] %vm1282, %v1267
        %1285 = vst.msk [vmem:[#allocation3 + $0x20] sm:$0xff] %vm1282, %v1268
        %1286 = vst.msk [vmem:[#allocation3 + $0x30] sm:$0xff] %vm1282, %v1269
        %1287 = vst.msk [vmem:[#allocation3 + $0x40] sm:$0xff] %vm1282, %v1270
        %1288 = vst.msk [vmem:[#allocation3 + $0x50] sm:$0xff] %vm1282, %v1271
        %1289 = vst.msk [vmem:[#allocation3 + $0x60] sm:$0xff] %vm1282, %v1272
        %1290 = vst.msk [vmem:[#allocation3 + $0x70] sm:$0xff] %vm1282, %v1273
        %v1291 = vld [vmem:[#allocation2] sm:$0xf]
        %v1292 = vld [vmem:[#allocation2 + $0x4] sm:$0xf]
        %v1293 = vld [vmem:[#allocation2 + $0x8] sm:$0x1]
        %v1294 = vld [vmem:[#allocation2 + $0xc] sm:$0xf]
        %v1295 = vld [vmem:[#allocation2 + $0x10] sm:$0xf]
        %v1296 = vld [vmem:[#allocation2 + $0x14] sm:$0x1]
        %v1297 = vld [vmem:[#allocation2 + $0x18] sm:$0xf]
        %v1298 = vld [vmem:[#allocation2 + $0x1c] sm:$0xf]
        %v1299 = vld [vmem:[#allocation2 + $0x20] sm:$0x1]
        %v1300 = vld [vmem:[#allocation2 + $0x24] sm:$0xf]
        %v1301 = vld [vmem:[#allocation2 + $0x28] sm:$0xf]
        %v1302 = vld [vmem:[#allocation2 + $0x2c] sm:$0x1]
        %v1303 = vld [vmem:[#allocation2 + $0x30] sm:$0xf]
        %v1304 = vld [vmem:[#allocation2 + $0x34] sm:$0xf]
        %v1305 = vld [vmem:[#allocation2 + $0x38] sm:$0x1]
        %v1306 = vld [vmem:[#allocation2 + $0x3c] sm:$0xf]
        %v1307 = vld [vmem:[#allocation2 + $0x40] sm:$0xf]
        %v1308 = vld [vmem:[#allocation2 + $0x44] sm:$0x1]
        %v1309 = vld [vmem:[#allocation2 + $0x48] sm:$0xf]
        %v1310 = vld [vmem:[#allocation2 + $0x4c] sm:$0xf]
        %v1311 = vld [vmem:[#allocation2 + $0x50] sm:$0x1]
        %v1312 = vld [vmem:[#allocation2 + $0x54] sm:$0xf]
        %v1313 = vld [vmem:[#allocation2 + $0x58] sm:$0xf]
        %v1314 = vld [vmem:[#allocation2 + $0x5c] sm:$0x1]
        %vm1315 = vsmask.f32 3328
        %vm1316 = vsmask.f32 7440
        %vm1317 = vmor %vm1315, %vm1316
        %v1319 = vshrl.u32 %v1291, 16
        %v1321 = vrot.slane %v1319, 4
        %v1322 = vshll.u32 %v1291, 16
        %v1324 = vrot.slane %v1322, 5
        %v1325 = vor.u32 %v1321, %v1324
        %v1326 = vrot.slane %v1325, 4
        %v1328 = vshll.u32 %v1292, 16
        %v1330 = vrot.slane %v1328, 5
        %v1331 = vsel %vm1317, %v1326, %v1330
        %v1332 = vshrl.u32 %v1292, 16
        %v1334 = vrot.slane %v1332, 4
        %v1335 = vor.u32 %v1334, %v1330
        %v1336 = vrot.slane %v1335, 4
        %v1338 = vshll.u32 %v1293, 16
        %v1340 = vrot.slane %v1338, 5
        %v1341 = vsel %vm1317, %v1336, %v1340
        %v1343 = vshrl.u32 %v1294, 16
        %v1345 = vrot.slane %v1343, 4
        %v1346 = vshll.u32 %v1294, 16
        %v1348 = vrot.slane %v1346, 5
        %v1349 = vor.u32 %v1345, %v1348
        %v1350 = vrot.slane %v1349, 4
        %v1352 = vshll.u32 %v1295, 16
        %v1354 = vrot.slane %v1352, 5
        %v1355 = vsel %vm1317, %v1350, %v1354
        %v1356 = vshrl.u32 %v1295, 16
        %v1358 = vrot.slane %v1356, 4
        %v1359 = vor.u32 %v1358, %v1354
        %v1360 = vrot.slane %v1359, 4
        %v1362 = vshll.u32 %v1296, 16
        %v1364 = vrot.slane %v1362, 5
        %v1365 = vsel %vm1317, %v1360, %v1364
        %v1367 = vshrl.u32 %v1297, 16
        %v1369 = vrot.slane %v1367, 4
        %v1370 = vshll.u32 %v1297, 16
        %v1372 = vrot.slane %v1370, 5
        %v1373 = vor.u32 %v1369, %v1372
        %v1374 = vrot.slane %v1373, 4
        %v1376 = vshll.u32 %v1298, 16
        %v1378 = vrot.slane %v1376, 5
        %v1379 = vsel %vm1317, %v1374, %v1378
        %v1380 = vshrl.u32 %v1298, 16
        %v1382 = vrot.slane %v1380, 4
        %v1383 = vor.u32 %v1382, %v1378
        %v1384 = vrot.slane %v1383, 4
        %v1386 = vshll.u32 %v1299, 16
        %v1388 = vrot.slane %v1386, 5
        %v1389 = vsel %vm1317, %v1384, %v1388
        %v1391 = vshrl.u32 %v1300, 16
        %v1393 = vrot.slane %v1391, 4
        %v1394 = vshll.u32 %v1300, 16
        %v1396 = vrot.slane %v1394, 5
        %v1397 = vor.u32 %v1393, %v1396
        %v1398 = vrot.slane %v1397, 4
        %v1400 = vshll.u32 %v1301, 16
        %v1402 = vrot.slane %v1400, 5
        %v1403 = vsel %vm1317, %v1398, %v1402
        %v1404 = vshrl.u32 %v1301, 16
        %v1406 = vrot.slane %v1404, 4
        %v1407 = vor.u32 %v1406, %v1402
        %v1408 = vrot.slane %v1407, 4
        %v1410 = vshll.u32 %v1302, 16
        %v1412 = vrot.slane %v1410, 5
        %v1413 = vsel %vm1317, %v1408, %v1412
        %v1415 = vshrl.u32 %v1303, 16
        %v1417 = vrot.slane %v1415, 4
        %v1418 = vshll.u32 %v1303, 16
        %v1420 = vrot.slane %v1418, 5
        %v1421 = vor.u32 %v1417, %v1420
        %v1422 = vrot.slane %v1421, 4
        %v1424 = vshll.u32 %v1304, 16
        %v1426 = vrot.slane %v1424, 5
        %v1427 = vsel %vm1317, %v1422, %v1426
        %v1428 = vshrl.u32 %v1304, 16
        %v1430 = vrot.slane %v1428, 4
        %v1431 = vor.u32 %v1430, %v1426
        %v1432 = vrot.slane %v1431, 4
        %v1434 = vshll.u32 %v1305, 16
        %v1436 = vrot.slane %v1434, 5
        %v1437 = vsel %vm1317, %v1432, %v1436
        %v1439 = vshrl.u32 %v1306, 16
        %v1441 = vrot.slane %v1439, 4
        %v1442 = vshll.u32 %v1306, 16
        %v1444 = vrot.slane %v1442, 5
        %v1445 = vor.u32 %v1441, %v1444
        %v1446 = vrot.slane %v1445, 4
        %v1448 = vshll.u32 %v1307, 16
        %v1450 = vrot.slane %v1448, 5
        %v1451 = vsel %vm1317, %v1446, %v1450
        %v1452 = vshrl.u32 %v1307, 16
        %v1454 = vrot.slane %v1452, 4
        %v1455 = vor.u32 %v1454, %v1450
        %v1456 = vrot.slane %v1455, 4
        %v1458 = vshll.u32 %v1308, 16
        %v1460 = vrot.slane %v1458, 5
        %v1461 = vsel %vm1317, %v1456, %v1460
        %v1463 = vshrl.u32 %v1309, 16
        %v1465 = vrot.slane %v1463, 4
        %v1466 = vshll.u32 %v1309, 16
        %v1468 = vrot.slane %v1466, 5
        %v1469 = vor.u32 %v1465, %v1468
        %v1470 = vrot.slane %v1469, 4
        %v1472 = vshll.u32 %v1310, 16
        %v1474 = vrot.slane %v1472, 5
        %v1475 = vsel %vm1317, %v1470, %v1474
        %v1476 = vshrl.u32 %v1310, 16
        %v1478 = vrot.slane %v1476, 4
        %v1479 = vor.u32 %v1478, %v1474
        %v1480 = vrot.slane %v1479, 4
        %v1482 = vshll.u32 %v1311, 16
        %v1484 = vrot.slane %v1482, 5
        %v1485 = vsel %vm1317, %v1480, %v1484
        %v1487 = vshrl.u32 %v1312, 16
        %v1489 = vrot.slane %v1487, 4
        %v1490 = vshll.u32 %v1312, 16
        %v1492 = vrot.slane %v1490, 5
        %v1493 = vor.u32 %v1489, %v1492
        %v1494 = vrot.slane %v1493, 4
        %v1496 = vshll.u32 %v1313, 16
        %v1498 = vrot.slane %v1496, 5
        %v1499 = vsel %vm1317, %v1494, %v1498
        %v1500 = vshrl.u32 %v1313, 16
        %v1502 = vrot.slane %v1500, 4
        %v1503 = vor.u32 %v1502, %v1498
        %v1504 = vrot.slane %v1503, 4
        %v1506 = vshll.u32 %v1314, 16
        %v1508 = vrot.slane %v1506, 5
        %v1509 = vsel %vm1317, %v1504, %v1508
        %v1510 = vunpack.c.l.b16 %v1331
        %v1511 = vunpack.c.l.b16 %v1341
        %v1512 = vunpack.c.l.b16 %v1355
        %v1513 = vunpack.c.l.b16 %v1365
        %v1514 = vunpack.c.l.b16 %v1379
        %v1515 = vunpack.c.l.b16 %v1389
        %v1516 = vunpack.c.l.b16 %v1403
        %v1517 = vunpack.c.l.b16 %v1413
        %v1518 = vunpack.c.l.b16 %v1427
        %v1519 = vunpack.c.l.b16 %v1437
        %v1520 = vunpack.c.l.b16 %v1451
        %v1521 = vunpack.c.l.b16 %v1461
        %v1522 = vunpack.c.l.b16 %v1475
        %v1523 = vunpack.c.l.b16 %v1485
        %v1524 = vunpack.c.l.b16 %v1499
        %v1525 = vunpack.c.l.b16 %v1509
        %v1526 = vpack.c.b16 %v1511, %v1510
        %v1527 = vpack.c.b16 %v1513, %v1512
        %v1528 = vpack.c.b16 %v1515, %v1514
        %v1529 = vpack.c.b16 %v1517, %v1516
        %v1530 = vpack.c.b16 %v1519, %v1518
        %v1531 = vpack.c.b16 %v1521, %v1520
        %v1532 = vpack.c.b16 %v1523, %v1522
        %v1533 = vpack.c.b16 %v1525, %v1524
        %1534 = vrot.lane.b32.xlu0 %v1526, 16
        %v1535 = vpop.permute.xlu0 %1534
        %1536 = vrot.lane.b32.xlu0 %v1527, 16
        %v1537 = vpop.permute.xlu0 %1536
        %1538 = vrot.lane.b32.xlu0 %v1528, 16
        %v1539 = vpop.permute.xlu0 %1538
        %1540 = vrot.lane.b32.xlu0 %v1529, 16
        %v1541 = vpop.permute.xlu0 %1540
        %1542 = vrot.lane.b32.xlu0 %v1530, 16
        %v1543 = vpop.permute.xlu0 %1542
        %1544 = vrot.lane.b32.xlu0 %v1531, 16
        %v1545 = vpop.permute.xlu0 %1544
        %1546 = vrot.lane.b32.xlu0 %v1532, 16
        %v1547 = vpop.permute.xlu0 %1546
        %1548 = vrot.lane.b32.xlu0 %v1533, 16
        %v1549 = vpop.permute.xlu0 %1548
        %vm1558 = vcmask 261248
        %1559 = vst.msk [vmem:[#allocation3] sm:$0xff] %vm1558, %v1535
        %1560 = vst.msk [vmem:[#allocation3 + $0x10] sm:$0xff] %vm1558, %v1537
        %1561 = vst.msk [vmem:[#allocation3 + $0x20] sm:$0xff] %vm1558, %v1539
        %1562 = vst.msk [vmem:[#allocation3 + $0x30] sm:$0xff] %vm1558, %v1541
        %1563 = vst.msk [vmem:[#allocation3 + $0x40] sm:$0xff] %vm1558, %v1543
        %1564 = vst.msk [vmem:[#allocation3 + $0x50] sm:$0xff] %vm1558, %v1545
        %1565 = vst.msk [vmem:[#allocation3 + $0x60] sm:$0xff] %vm1558, %v1547
        %1566 = vst.msk [vmem:[#allocation3 + $0x70] sm:$0xff] %vm1558, %v1549
        %v1567 = vld [vmem:[#allocation2] sm:$0xe]
        %v1568 = vld [vmem:[#allocation2 + $0x4] sm:$0xf]
        %v1569 = vld [vmem:[#allocation2 + $0x8] sm:$0x1]
        %v1570 = vld [vmem:[#allocation2 + $0xc] sm:$0xe]
        %v1571 = vld [vmem:[#allocation2 + $0x10] sm:$0xf]
        %v1572 = vld [vmem:[#allocation2 + $0x14] sm:$0x1]
        %v1573 = vld [vmem:[#allocation2 + $0x18] sm:$0xe]
        %v1574 = vld [vmem:[#allocation2 + $0x1c] sm:$0xf]
        %v1575 = vld [vmem:[#allocation2 + $0x20] sm:$0x1]
        %v1576 = vld [vmem:[#allocation2 + $0x24] sm:$0xe]
        %v1577 = vld [vmem:[#allocation2 + $0x28] sm:$0xf]
        %v1578 = vld [vmem:[#allocation2 + $0x2c] sm:$0x1]
        %v1579 = vld [vmem:[#allocation2 + $0x30] sm:$0xe]
        %v1580 = vld [vmem:[#allocation2 + $0x34] sm:$0xf]
        %v1581 = vld [vmem:[#allocation2 + $0x38] sm:$0x1]
        %v1582 = vld [vmem:[#allocation2 + $0x3c] sm:$0xe]
        %v1583 = vld [vmem:[#allocation2 + $0x40] sm:$0xf]
        %v1584 = vld [vmem:[#allocation2 + $0x44] sm:$0x1]
        %v1585 = vld [vmem:[#allocation2 + $0x48] sm:$0xe]
        %v1586 = vld [vmem:[#allocation2 + $0x4c] sm:$0xf]
        %v1587 = vld [vmem:[#allocation2 + $0x50] sm:$0x1]
        %v1588 = vld [vmem:[#allocation2 + $0x54] sm:$0xe]
        %v1589 = vld [vmem:[#allocation2 + $0x58] sm:$0xf]
        %v1590 = vld [vmem:[#allocation2 + $0x5c] sm:$0x1]
        %vm1615 = vcmask 1042432
        %vm1616 = vcmask 1046532
        %vm1617 = vmor %vm1615, %vm1616
        %v1618 = vrot.slane %v1567, 5
        %v1619 = vrot.slane %v1618, 4
        %v1620 = vrot.slane %v1568, 5
        %v1621 = vsel %vm1617, %v1619, %v1620
        %v1622 = vrot.slane %v1620, 4
        %v1623 = vrot.slane %v1569, 5
        %v1624 = vsel %vm1617, %v1622, %v1623
        %v1625 = vrot.slane %v1570, 5
        %v1626 = vrot.slane %v1625, 4
        %v1627 = vrot.slane %v1571, 5
        %v1628 = vsel %vm1617, %v1626, %v1627
        %v1629 = vrot.slane %v1627, 4
        %v1630 = vrot.slane %v1572, 5
        %v1631 = vsel %vm1617, %v1629, %v1630
        %v1632 = vrot.slane %v1573, 5
        %v1633 = vrot.slane %v1632, 4
        %v1634 = vrot.slane %v1574, 5
        %v1635 = vsel %vm1617, %v1633, %v1634
        %v1636 = vrot.slane %v1634, 4
        %v1637 = vrot.slane %v1575, 5
        %v1638 = vsel %vm1617, %v1636, %v1637
        %v1639 = vrot.slane %v1576, 5
        %v1640 = vrot.slane %v1639, 4
        %v1641 = vrot.slane %v1577, 5
        %v1642 = vsel %vm1617, %v1640, %v1641
        %v1643 = vrot.slane %v1641, 4
        %v1644 = vrot.slane %v1578, 5
        %v1645 = vsel %vm1617, %v1643, %v1644
        %v1646 = vrot.slane %v1579, 5
        %v1647 = vrot.slane %v1646, 4
        %v1648 = vrot.slane %v1580, 5
        %v1649 = vsel %vm1617, %v1647, %v1648
        %v1650 = vrot.slane %v1648, 4
        %v1651 = vrot.slane %v1581, 5
        %v1652 = vsel %vm1617, %v1650, %v1651
        %v1653 = vrot.slane %v1582, 5
        %v1654 = vrot.slane %v1653, 4
        %v1655 = vrot.slane %v1583, 5
        %v1656 = vsel %vm1617, %v1654, %v1655
        %v1657 = vrot.slane %v1655, 4
        %v1658 = vrot.slane %v1584, 5
        %v1659 = vsel %vm1617, %v1657, %v1658
        %v1660 = vrot.slane %v1585, 5
        %v1661 = vrot.slane %v1660, 4
        %v1662 = vrot.slane %v1586, 5
        %v1663 = vsel %vm1617, %v1661, %v1662
        %v1664 = vrot.slane %v1662, 4
        %v1665 = vrot.slane %v1587, 5
        %v1666 = vsel %vm1617, %v1664, %v1665
        %v1667 = vrot.slane %v1588, 5
        %v1668 = vrot.slane %v1667, 4
        %v1669 = vrot.slane %v1589, 5
        %v1670 = vsel %vm1617, %v1668, %v1669
        %v1671 = vrot.slane %v1669, 4
        %v1672 = vrot.slane %v1590, 5
        %v1673 = vsel %vm1617, %v1671, %v1672
        %v1674 = vunpack.c.l.b16 %v1621
        %v1675 = vunpack.c.l.b16 %v1624
        %v1676 = vunpack.c.l.b16 %v1628
        %v1677 = vunpack.c.l.b16 %v1631
        %v1678 = vunpack.c.l.b16 %v1635
        %v1679 = vunpack.c.l.b16 %v1638
        %v1680 = vunpack.c.l.b16 %v1642
        %v1681 = vunpack.c.l.b16 %v1645
        %v1682 = vunpack.c.l.b16 %v1649
        %v1683 = vunpack.c.l.b16 %v1652
        %v1684 = vunpack.c.l.b16 %v1656
        %v1685 = vunpack.c.l.b16 %v1659
        %v1686 = vunpack.c.l.b16 %v1663
        %v1687 = vunpack.c.l.b16 %v1666
        %v1688 = vunpack.c.l.b16 %v1670
        %v1689 = vunpack.c.l.b16 %v1673
        %v1690 = vpack.c.b16 %v1675, %v1674
        %v1691 = vpack.c.b16 %v1677, %v1676
        %v1692 = vpack.c.b16 %v1679, %v1678
        %v1693 = vpack.c.b16 %v1681, %v1680
        %v1694 = vpack.c.b16 %v1683, %v1682
        %v1695 = vpack.c.b16 %v1685, %v1684
        %v1696 = vpack.c.b16 %v1687, %v1686
        %v1697 = vpack.c.b16 %v1689, %v1688
        %1698 = vrot.lane.b32.xlu0 %v1690, 32
        %v1699 = vpop.permute.xlu0 %1698
        %1700 = vrot.lane.b32.xlu0 %v1691, 32
        %v1701 = vpop.permute.xlu0 %1700
        %1702 = vrot.lane.b32.xlu0 %v1692, 32
        %v1703 = vpop.permute.xlu0 %1702
        %1704 = vrot.lane.b32.xlu0 %v1693, 32
        %v1705 = vpop.permute.xlu0 %1704
        %1706 = vrot.lane.b32.xlu0 %v1694, 32
        %v1707 = vpop.permute.xlu0 %1706
        %1708 = vrot.lane.b32.xlu0 %v1695, 32
        %v1709 = vpop.permute.xlu0 %1708
        %1710 = vrot.lane.b32.xlu0 %v1696, 32
        %v1711 = vpop.permute.xlu0 %1710
        %1712 = vrot.lane.b32.xlu0 %v1697, 32
        %v1713 = vpop.permute.xlu0 %1712
        %vm1722 = vcmask 392448
        %1723 = vst.msk [vmem:[#allocation3] sm:$0xff] %vm1722, %v1699
        %1724 = vst.msk [vmem:[#allocation3 + $0x10] sm:$0xff] %vm1722, %v1701
        %1725 = vst.msk [vmem:[#allocation3 + $0x20] sm:$0xff] %vm1722, %v1703
        %1726 = vst.msk [vmem:[#allocation3 + $0x30] sm:$0xff] %vm1722, %v1705
        %1727 = vst.msk [vmem:[#allocation3 + $0x40] sm:$0xff] %vm1722, %v1707
        %1728 = vst.msk [vmem:[#allocation3 + $0x50] sm:$0xff] %vm1722, %v1709
        %1729 = vst.msk [vmem:[#allocation3 + $0x60] sm:$0xff] %vm1722, %v1711
        %1730 = vst.msk [vmem:[#allocation3 + $0x70] sm:$0xff] %vm1722, %v1713
        %s1731 = scalar_lea.vmem [#allocation2], 12
        %v1732 = vld [vmem:[%s1731] sm:$0xf]
        %v1733 = vld [vmem:[%s1731 + $0x4] sm:$0xf]
        %v1734 = vld [vmem:[%s1731 + $0xc] sm:$0xf]
        %v1735 = vld [vmem:[%s1731 + $0x10] sm:$0xf]
        %v1736 = vld [vmem:[%s1731 + $0x18] sm:$0xf]
        %v1737 = vld [vmem:[%s1731 + $0x1c] sm:$0xf]
        %v1738 = vld [vmem:[%s1731 + $0x24] sm:$0xf]
        %v1739 = vld [vmem:[%s1731 + $0x28] sm:$0xf]
        %v1740 = vld [vmem:[%s1731 + $0x30] sm:$0xf]
        %v1741 = vld [vmem:[%s1731 + $0x34] sm:$0xf]
        %v1742 = vld [vmem:[%s1731 + $0x3c] sm:$0xf]
        %v1743 = vld [vmem:[%s1731 + $0x40] sm:$0xf]
        %v1744 = vld [vmem:[%s1731 + $0x48] sm:$0xf]
        %v1745 = vld [vmem:[%s1731 + $0x4c] sm:$0xf]
        %v1746 = vld [vmem:[%s1731 + $0x54] sm:$0xf]
        %v1747 = vld [vmem:[%s1731 + $0x58] sm:$0xf]
        %v1764 = vunpack.c.l.b16 %v1732
        %v1765 = vunpack.c.l.b16 %v1733
        %v1766 = vunpack.c.l.b16 %v1734
        %v1767 = vunpack.c.l.b16 %v1735
        %v1768 = vunpack.c.l.b16 %v1736
        %v1769 = vunpack.c.l.b16 %v1737
        %v1770 = vunpack.c.l.b16 %v1738
        %v1771 = vunpack.c.l.b16 %v1739
        %v1772 = vunpack.c.l.b16 %v1740
        %v1773 = vunpack.c.l.b16 %v1741
        %v1774 = vunpack.c.l.b16 %v1742
        %v1775 = vunpack.c.l.b16 %v1743
        %v1776 = vunpack.c.l.b16 %v1744
        %v1777 = vunpack.c.l.b16 %v1745
        %v1778 = vunpack.c.l.b16 %v1746
        %v1779 = vunpack.c.l.b16 %v1747
        %v1780 = vpack.c.b16 %v1765, %v1764
        %v1781 = vpack.c.b16 %v1767, %v1766
        %v1782 = vpack.c.b16 %v1769, %v1768
        %v1783 = vpack.c.b16 %v1771, %v1770
        %v1784 = vpack.c.b16 %v1773, %v1772
        %v1785 = vpack.c.b16 %v1775, %v1774
        %v1786 = vpack.c.b16 %v1777, %v1776
        %v1787 = vpack.c.b16 %v1779, %v1778
        %1788 = vrot.lane.b32.xlu0 %v1780, 48
        %v1789 = vpop.permute.xlu0 %1788
        %1790 = vrot.lane.b32.xlu0 %v1781, 48
        %v1791 = vpop.permute.xlu0 %1790
        %1792 = vrot.lane.b32.xlu0 %v1782, 48
        %v1793 = vpop.permute.xlu0 %1792
        %1794 = vrot.lane.b32.xlu0 %v1783, 48
        %v1795 = vpop.permute.xlu0 %1794
        %1796 = vrot.lane.b32.xlu0 %v1784, 48
        %v1797 = vpop.permute.xlu0 %1796
        %1798 = vrot.lane.b32.xlu0 %v1785, 48
        %v1799 = vpop.permute.xlu0 %1798
        %1800 = vrot.lane.b32.xlu0 %v1786, 48
        %v1801 = vpop.permute.xlu0 %1800
        %1802 = vrot.lane.b32.xlu0 %v1787, 48
        %v1803 = vpop.permute.xlu0 %1802
        %vm1812 = vcmask 523648
        %1813 = vst.msk [vmem:[#allocation3] sm:$0xff] %vm1812, %v1789
        %1814 = vst.msk [vmem:[#allocation3 + $0x10] sm:$0xff] %vm1812, %v1791
        %1815 = vst.msk [vmem:[#allocation3 + $0x20] sm:$0xff] %vm1812, %v1793
        %1816 = vst.msk [vmem:[#allocation3 + $0x30] sm:$0xff] %vm1812, %v1795
        %1817 = vst.msk [vmem:[#allocation3 + $0x40] sm:$0xff] %vm1812, %v1797
        %1818 = vst.msk [vmem:[#allocation3 + $0x50] sm:$0xff] %vm1812, %v1799
        %1819 = vst.msk [vmem:[#allocation3 + $0x60] sm:$0xff] %vm1812, %v1801
        %1820 = vst.msk [vmem:[#allocation3 + $0x70] sm:$0xff] %vm1812, %v1803
        %v1821 = vld [vmem:[%s1731] sm:$0xf]
        %v1822 = vld [vmem:[%s1731 + $0x4] sm:$0xf]
        %v1823 = vld [vmem:[%s1731 + $0x8] sm:$0x1]
        %v1824 = vld [vmem:[%s1731 + $0xc] sm:$0xf]
        %v1825 = vld [vmem:[%s1731 + $0x10] sm:$0xf]
        %v1826 = vld [vmem:[%s1731 + $0x14] sm:$0x1]
        %v1827 = vld [vmem:[%s1731 + $0x18] sm:$0xf]
        %v1828 = vld [vmem:[%s1731 + $0x1c] sm:$0xf]
        %v1829 = vld [vmem:[%s1731 + $0x20] sm:$0x1]
        %v1830 = vld [vmem:[%s1731 + $0x24] sm:$0xf]
        %v1831 = vld [vmem:[%s1731 + $0x28] sm:$0xf]
        %v1832 = vld [vmem:[%s1731 + $0x2c] sm:$0x1]
        %v1833 = vld [vmem:[%s1731 + $0x30] sm:$0xf]
        %v1834 = vld [vmem:[%s1731 + $0x34] sm:$0xf]
        %v1835 = vld [vmem:[%s1731 + $0x38] sm:$0x1]
        %v1836 = vld [vmem:[%s1731 + $0x3c] sm:$0xf]
        %v1837 = vld [vmem:[%s1731 + $0x40] sm:$0xf]
        %v1838 = vld [vmem:[%s1731 + $0x44] sm:$0x1]
        %v1839 = vld [vmem:[%s1731 + $0x48] sm:$0xf]
        %v1840 = vld [vmem:[%s1731 + $0x4c] sm:$0xf]
        %v1841 = vld [vmem:[%s1731 + $0x50] sm:$0x1]
        %v1842 = vld [vmem:[%s1731 + $0x54] sm:$0xf]
        %v1843 = vld [vmem:[%s1731 + $0x58] sm:$0xf]
        %v1844 = vld [vmem:[%s1731 + $0x5c] sm:$0x1]
        %v1846 = vshrl.u32 %v1821, 16
        %v1848 = vrot.slane %v1846, 4
        %v1849 = vshll.u32 %v1821, 16
        %v1851 = vrot.slane %v1849, 5
        %v1852 = vor.u32 %v1848, %v1851
        %v1853 = vrot.slane %v1852, 4
        %v1855 = vshll.u32 %v1822, 16
        %v1857 = vrot.slane %v1855, 5
        %v1858 = vsel %vm1317, %v1853, %v1857
        %v1859 = vshrl.u32 %v1822, 16
        %v1861 = vrot.slane %v1859, 4
        %v1862 = vor.u32 %v1861, %v1857
        %v1863 = vrot.slane %v1862, 4
        %v1865 = vshll.u32 %v1823, 16
        %v1867 = vrot.slane %v1865, 5
        %v1868 = vsel %vm1317, %v1863, %v1867
        %v1870 = vshrl.u32 %v1824, 16
        %v1872 = vrot.slane %v1870, 4
        %v1873 = vshll.u32 %v1824, 16
        %v1875 = vrot.slane %v1873, 5
        %v1876 = vor.u32 %v1872, %v1875
        %v1877 = vrot.slane %v1876, 4
        %v1879 = vshll.u32 %v1825, 16
        %v1881 = vrot.slane %v1879, 5
        %v1882 = vsel %vm1317, %v1877, %v1881
        %v1883 = vshrl.u32 %v1825, 16
        %v1885 = vrot.slane %v1883, 4
        %v1886 = vor.u32 %v1885, %v1881
        %v1887 = vrot.slane %v1886, 4
        %v1889 = vshll.u32 %v1826, 16
        %v1891 = vrot.slane %v1889, 5
        %v1892 = vsel %vm1317, %v1887, %v1891
        %v1894 = vshrl.u32 %v1827, 16
        %v1896 = vrot.slane %v1894, 4
        %v1897 = vshll.u32 %v1827, 16
        %v1899 = vrot.slane %v1897, 5
        %v1900 = vor.u32 %v1896, %v1899
        %v1901 = vrot.slane %v1900, 4
        %v1903 = vshll.u32 %v1828, 16
        %v1905 = vrot.slane %v1903, 5
        %v1906 = vsel %vm1317, %v1901, %v1905
        %v1907 = vshrl.u32 %v1828, 16
        %v1909 = vrot.slane %v1907, 4
        %v1910 = vor.u32 %v1909, %v1905
        %v1911 = vrot.slane %v1910, 4
        %v1913 = vshll.u32 %v1829, 16
        %v1915 = vrot.slane %v1913, 5
        %v1916 = vsel %vm1317, %v1911, %v1915
        %v1918 = vshrl.u32 %v1830, 16
        %v1920 = vrot.slane %v1918, 4
        %v1921 = vshll.u32 %v1830, 16
        %v1923 = vrot.slane %v1921, 5
        %v1924 = vor.u32 %v1920, %v1923
        %v1925 = vrot.slane %v1924, 4
        %v1927 = vshll.u32 %v1831, 16
        %v1929 = vrot.slane %v1927, 5
        %v1930 = vsel %vm1317, %v1925, %v1929
        %v1931 = vshrl.u32 %v1831, 16
        %v1933 = vrot.slane %v1931, 4
        %v1934 = vor.u32 %v1933, %v1929
        %v1935 = vrot.slane %v1934, 4
        %v1937 = vshll.u32 %v1832, 16
        %v1939 = vrot.slane %v1937, 5
        %v1940 = vsel %vm1317, %v1935, %v1939
        %v1942 = vshrl.u32 %v1833, 16
        %v1944 = vrot.slane %v1942, 4
        %v1945 = vshll.u32 %v1833, 16
        %v1947 = vrot.slane %v1945, 5
        %v1948 = vor.u32 %v1944, %v1947
        %v1949 = vrot.slane %v1948, 4
        %v1951 = vshll.u32 %v1834, 16
        %v1953 = vrot.slane %v1951, 5
        %v1954 = vsel %vm1317, %v1949, %v1953
        %v1955 = vshrl.u32 %v1834, 16
        %v1957 = vrot.slane %v1955, 4
        %v1958 = vor.u32 %v1957, %v1953
        %v1959 = vrot.slane %v1958, 4
        %v1961 = vshll.u32 %v1835, 16
        %v1963 = vrot.slane %v1961, 5
        %v1964 = vsel %vm1317, %v1959, %v1963
        %v1966 = vshrl.u32 %v1836, 16
        %v1968 = vrot.slane %v1966, 4
        %v1969 = vshll.u32 %v1836, 16
        %v1971 = vrot.slane %v1969, 5
        %v1972 = vor.u32 %v1968, %v1971
        %v1973 = vrot.slane %v1972, 4
        %v1975 = vshll.u32 %v1837, 16
        %v1977 = vrot.slane %v1975, 5
        %v1978 = vsel %vm1317, %v1973, %v1977
        %v1979 = vshrl.u32 %v1837, 16
        %v1981 = vrot.slane %v1979, 4
        %v1982 = vor.u32 %v1981, %v1977
        %v1983 = vrot.slane %v1982, 4
        %v1985 = vshll.u32 %v1838, 16
        %v1987 = vrot.slane %v1985, 5
        %v1988 = vsel %vm1317, %v1983, %v1987
        %v1990 = vshrl.u32 %v1839, 16
        %v1992 = vrot.slane %v1990, 4
        %v1993 = vshll.u32 %v1839, 16
        %v1995 = vrot.slane %v1993, 5
        %v1996 = vor.u32 %v1992, %v1995
        %v1997 = vrot.slane %v1996, 4
        %v1999 = vshll.u32 %v1840, 16
        %v2001 = vrot.slane %v1999, 5
        %v2002 = vsel %vm1317, %v1997, %v2001
        %v2003 = vshrl.u32 %v1840, 16
        %v2005 = vrot.slane %v2003, 4
        %v2006 = vor.u32 %v2005, %v2001
        %v2007 = vrot.slane %v2006, 4
        %v2009 = vshll.u32 %v1841, 16
        %v2011 = vrot.slane %v2009, 5
        %v2012 = vsel %vm1317, %v2007, %v2011
        %v2014 = vshrl.u32 %v1842, 16
        %v2016 = vrot.slane %v2014, 4
        %v2017 = vshll.u32 %v1842, 16
        %v2019 = vrot.slane %v2017, 5
        %v2020 = vor.u32 %v2016, %v2019
        %v2021 = vrot.slane %v2020, 4
        %v2023 = vshll.u32 %v1843, 16
        %v2025 = vrot.slane %v2023, 5
        %v2026 = vsel %vm1317, %v2021, %v2025
        %v2027 = vshrl.u32 %v1843, 16
        %v2029 = vrot.slane %v2027, 4
        %v2030 = vor.u32 %v2029, %v2025
        %v2031 = vrot.slane %v2030, 4
        %v2033 = vshll.u32 %v1844, 16
        %v2035 = vrot.slane %v2033, 5
        %v2036 = vsel %vm1317, %v2031, %v2035
        %v2037 = vunpack.c.l.b16 %v1858
        %v2038 = vunpack.c.l.b16 %v1868
        %v2039 = vunpack.c.l.b16 %v1882
        %v2040 = vunpack.c.l.b16 %v1892
        %v2041 = vunpack.c.l.b16 %v1906
        %v2042 = vunpack.c.l.b16 %v1916
        %v2043 = vunpack.c.l.b16 %v1930
        %v2044 = vunpack.c.l.b16 %v1940
        %v2045 = vunpack.c.l.b16 %v1954
        %v2046 = vunpack.c.l.b16 %v1964
        %v2047 = vunpack.c.l.b16 %v1978
        %v2048 = vunpack.c.l.b16 %v1988
        %v2049 = vunpack.c.l.b16 %v2002
        %v2050 = vunpack.c.l.b16 %v2012
        %v2051 = vunpack.c.l.b16 %v2026
        %v2052 = vunpack.c.l.b16 %v2036
        %v2053 = vpack.c.b16 %v2038, %v2037
        %v2054 = vpack.c.b16 %v2040, %v2039
        %v2055 = vpack.c.b16 %v2042, %v2041
        %v2056 = vpack.c.b16 %v2044, %v2043
        %v2057 = vpack.c.b16 %v2046, %v2045
        %v2058 = vpack.c.b16 %v2048, %v2047
        %v2059 = vpack.c.b16 %v2050, %v2049
        %v2060 = vpack.c.b16 %v2052, %v2051
        %2061 = vrot.lane.b32.xlu0 %v2053, 64
        %v2062 = vpop.permute.xlu0 %2061
        %2063 = vrot.lane.b32.xlu0 %v2054, 64
        %v2064 = vpop.permute.xlu0 %2063
        %2065 = vrot.lane.b32.xlu0 %v2055, 64
        %v2066 = vpop.permute.xlu0 %2065
        %2067 = vrot.lane.b32.xlu0 %v2056, 64
        %v2068 = vpop.permute.xlu0 %2067
        %2069 = vrot.lane.b32.xlu0 %v2057, 64
        %v2070 = vpop.permute.xlu0 %2069
        %2071 = vrot.lane.b32.xlu0 %v2058, 64
        %v2072 = vpop.permute.xlu0 %2071
        %2073 = vrot.lane.b32.xlu0 %v2059, 64
        %v2074 = vpop.permute.xlu0 %2073
        %2075 = vrot.lane.b32.xlu0 %v2060, 64
        %v2076 = vpop.permute.xlu0 %2075
        %vm2085 = vcmask 654848
        %2086 = vst.msk [vmem:[#allocation3] sm:$0xff] %vm2085, %v2062
        %2087 = vst.msk [vmem:[#allocation3 + $0x10] sm:$0xff] %vm2085, %v2064
        %2088 = vst.msk [vmem:[#allocation3 + $0x20] sm:$0xff] %vm2085, %v2066
        %2089 = vst.msk [vmem:[#allocation3 + $0x30] sm:$0xff] %vm2085, %v2068
        %2090 = vst.msk [vmem:[#allocation3 + $0x40] sm:$0xff] %vm2085, %v2070
        %2091 = vst.msk [vmem:[#allocation3 + $0x50] sm:$0xff] %vm2085, %v2072
        %2092 = vst.msk [vmem:[#allocation3 + $0x60] sm:$0xff] %vm2085, %v2074
        %2093 = vst.msk [vmem:[#allocation3 + $0x70] sm:$0xff] %vm2085, %v2076
        %v2094 = vld [vmem:[%s1731] sm:$0xe]
        %v2095 = vld [vmem:[%s1731 + $0x4] sm:$0xf]
        %v2096 = vld [vmem:[%s1731 + $0x8] sm:$0x1]
        %v2097 = vld [vmem:[%s1731 + $0xc] sm:$0xe]
        %v2098 = vld [vmem:[%s1731 + $0x10] sm:$0xf]
        %v2099 = vld [vmem:[%s1731 + $0x14] sm:$0x1]
        %v2100 = vld [vmem:[%s1731 + $0x18] sm:$0xe]
        %v2101 = vld [vmem:[%s1731 + $0x1c] sm:$0xf]
        %v2102 = vld [vmem:[%s1731 + $0x20] sm:$0x1]
        %v2103 = vld [vmem:[%s1731 + $0x24] sm:$0xe]
        %v2104 = vld [vmem:[%s1731 + $0x28] sm:$0xf]
        %v2105 = vld [vmem:[%s1731 + $0x2c] sm:$0x1]
        %v2106 = vld [vmem:[%s1731 + $0x30] sm:$0xe]
        %v2107 = vld [vmem:[%s1731 + $0x34] sm:$0xf]
        %v2108 = vld [vmem:[%s1731 + $0x38] sm:$0x1]
        %v2109 = vld [vmem:[%s1731 + $0x3c] sm:$0xe]
        %v2110 = vld [vmem:[%s1731 + $0x40] sm:$0xf]
        %v2111 = vld [vmem:[%s1731 + $0x44] sm:$0x1]
        %v2112 = vld [vmem:[%s1731 + $0x48] sm:$0xe]
        %v2113 = vld [vmem:[%s1731 + $0x4c] sm:$0xf]
        %v2114 = vld [vmem:[%s1731 + $0x50] sm:$0x1]
        %v2115 = vld [vmem:[%s1731 + $0x54] sm:$0xe]
        %v2116 = vld [vmem:[%s1731 + $0x58] sm:$0xf]
        %v2117 = vld [vmem:[%s1731 + $0x5c] sm:$0x1]
        %v2142 = vrot.slane %v2094, 5
        %v2143 = vrot.slane %v2142, 4
        %v2144 = vrot.slane %v2095, 5
        %v2145 = vsel %vm1617, %v2143, %v2144
        %v2146 = vrot.slane %v2144, 4
        %v2147 = vrot.slane %v2096, 5
        %v2148 = vsel %vm1617, %v2146, %v2147
        %v2149 = vrot.slane %v2097, 5
        %v2150 = vrot.slane %v2149, 4
        %v2151 = vrot.slane %v2098, 5
        %v2152 = vsel %vm1617, %v2150, %v2151
        %v2153 = vrot.slane %v2151, 4
        %v2154 = vrot.slane %v2099, 5
        %v2155 = vsel %vm1617, %v2153, %v2154
        %v2156 = vrot.slane %v2100, 5
        %v2157 = vrot.slane %v2156, 4
        %v2158 = vrot.slane %v2101, 5
        %v2159 = vsel %vm1617, %v2157, %v2158
        %v2160 = vrot.slane %v2158, 4
        %v2161 = vrot.slane %v2102, 5
        %v2162 = vsel %vm1617, %v2160, %v2161
        %v2163 = vrot.slane %v2103, 5
        %v2164 = vrot.slane %v2163, 4
        %v2165 = vrot.slane %v2104, 5
        %v2166 = vsel %vm1617, %v2164, %v2165
        %v2167 = vrot.slane %v2165, 4
        %v2168 = vrot.slane %v2105, 5
        %v2169 = vsel %vm1617, %v2167, %v2168
        %v2170 = vrot.slane %v2106, 5
        %v2171 = vrot.slane %v2170, 4
        %v2172 = vrot.slane %v2107, 5
        %v2173 = vsel %vm1617, %v2171, %v2172
        %v2174 = vrot.slane %v2172, 4
        %v2175 = vrot.slane %v2108, 5
        %v2176 = vsel %vm1617, %v2174, %v2175
        %v2177 = vrot.slane %v2109, 5
        %v2178 = vrot.slane %v2177, 4
        %v2179 = vrot.slane %v2110, 5
        %v2180 = vsel %vm1617, %v2178, %v2179
        %v2181 = vrot.slane %v2179, 4
        %v2182 = vrot.slane %v2111, 5
        %v2183 = vsel %vm1617, %v2181, %v2182
        %v2184 = vrot.slane %v2112, 5
        %v2185 = vrot.slane %v2184, 4
        %v2186 = vrot.slane %v2113, 5
        %v2187 = vsel %vm1617, %v2185, %v2186
        %v2188 = vrot.slane %v2186, 4
        %v2189 = vrot.slane %v2114, 5
        %v2190 = vsel %vm1617, %v2188, %v2189
        %v2191 = vrot.slane %v2115, 5
        %v2192 = vrot.slane %v2191, 4
        %v2193 = vrot.slane %v2116, 5
        %v2194 = vsel %vm1617, %v2192, %v2193
        %v2195 = vrot.slane %v2193, 4
        %v2196 = vrot.slane %v2117, 5
        %v2197 = vsel %vm1617, %v2195, %v2196
        %v2198 = vunpack.c.l.b16 %v2145
        %v2199 = vunpack.c.l.b16 %v2148
        %v2200 = vunpack.c.l.b16 %v2152
        %v2201 = vunpack.c.l.b16 %v2155
        %v2202 = vunpack.c.l.b16 %v2159
        %v2203 = vunpack.c.l.b16 %v2162
        %v2204 = vunpack.c.l.b16 %v2166
        %v2205 = vunpack.c.l.b16 %v2169
        %v2206 = vunpack.c.l.b16 %v2173
        %v2207 = vunpack.c.l.b16 %v2176
        %v2208 = vunpack.c.l.b16 %v2180
        %v2209 = vunpack.c.l.b16 %v2183
        %v2210 = vunpack.c.l.b16 %v2187
        %v2211 = vunpack.c.l.b16 %v2190
        %v2212 = vunpack.c.l.b16 %v2194
        %v2213 = vunpack.c.l.b16 %v2197
        %v2214 = vpack.c.b16 %v2199, %v2198
        %v2215 = vpack.c.b16 %v2201, %v2200
        %v2216 = vpack.c.b16 %v2203, %v2202
        %v2217 = vpack.c.b16 %v2205, %v2204
        %v2218 = vpack.c.b16 %v2207, %v2206
        %v2219 = vpack.c.b16 %v2209, %v2208
        %v2220 = vpack.c.b16 %v2211, %v2210
        %v2221 = vpack.c.b16 %v2213, %v2212
        %2222 = vrot.lane.b32.xlu0 %v2214, 80
        %v2223 = vpop.permute.xlu0 %2222
        %2224 = vrot.lane.b32.xlu0 %v2215, 80
        %v2225 = vpop.permute.xlu0 %2224
        %2226 = vrot.lane.b32.xlu0 %v2216, 80
        %v2227 = vpop.permute.xlu0 %2226
        %2228 = vrot.lane.b32.xlu0 %v2217, 80
        %v2229 = vpop.permute.xlu0 %2228
        %2230 = vrot.lane.b32.xlu0 %v2218, 80
        %v2231 = vpop.permute.xlu0 %2230
        %2232 = vrot.lane.b32.xlu0 %v2219, 80
        %v2233 = vpop.permute.xlu0 %2232
        %2234 = vrot.lane.b32.xlu0 %v2220, 80
        %v2235 = vpop.permute.xlu0 %2234
        %2236 = vrot.lane.b32.xlu0 %v2221, 80
        %v2237 = vpop.permute.xlu0 %2236
        %vm2246 = vcmask 786048
        %2247 = vst.msk [vmem:[#allocation3] sm:$0xff] %vm2246, %v2223
        %2248 = vst.msk [vmem:[#allocation3 + $0x10] sm:$0xff] %vm2246, %v2225
        %2249 = vst.msk [vmem:[#allocation3 + $0x20] sm:$0xff] %vm2246, %v2227
        %2250 = vst.msk [vmem:[#allocation3 + $0x30] sm:$0xff] %vm2246, %v2229
        %2251 = vst.msk [vmem:[#allocation3 + $0x40] sm:$0xff] %vm2246, %v2231
        %2252 = vst.msk [vmem:[#allocation3 + $0x50] sm:$0xff] %vm2246, %v2233
        %2253 = vst.msk [vmem:[#allocation3 + $0x60] sm:$0xff] %vm2246, %v2235
        %2254 = vst.msk [vmem:[#allocation3 + $0x70] sm:$0xff] %vm2246, %v2237
        %s2255 = scalar_lea.vmem [#allocation2], 24
        %v2256 = vld [vmem:[%s2255] sm:$0xf]
        %v2257 = vld [vmem:[%s2255 + $0x4] sm:$0xf]
        %v2258 = vld [vmem:[%s2255 + $0xc] sm:$0xf]
        %v2259 = vld [vmem:[%s2255 + $0x10] sm:$0xf]
        %v2260 = vld [vmem:[%s2255 + $0x18] sm:$0xf]
        %v2261 = vld [vmem:[%s2255 + $0x1c] sm:$0xf]
        %v2262 = vld [vmem:[%s2255 + $0x24] sm:$0xf]
        %v2263 = vld [vmem:[%s2255 + $0x28] sm:$0xf]
        %v2264 = vld [vmem:[%s2255 + $0x30] sm:$0xf]
        %v2265 = vld [vmem:[%s2255 + $0x34] sm:$0xf]
        %v2266 = vld [vmem:[%s2255 + $0x3c] sm:$0xf]
        %v2267 = vld [vmem:[%s2255 + $0x40] sm:$0xf]
        %v2268 = vld [vmem:[%s2255 + $0x48] sm:$0xf]
        %v2269 = vld [vmem:[%s2255 + $0x4c] sm:$0xf]
        %v2270 = vld [vmem:[%s2255 + $0x54] sm:$0xf]
        %v2271 = vld [vmem:[%s2255 + $0x58] sm:$0xf]
        %v2288 = vunpack.c.l.b16 %v2256
        %v2289 = vunpack.c.l.b16 %v2257
        %v2290 = vunpack.c.l.b16 %v2258
        %v2291 = vunpack.c.l.b16 %v2259
        %v2292 = vunpack.c.l.b16 %v2260
        %v2293 = vunpack.c.l.b16 %v2261
        %v2294 = vunpack.c.l.b16 %v2262
        %v2295 = vunpack.c.l.b16 %v2263
        %v2296 = vunpack.c.l.b16 %v2264
        %v2297 = vunpack.c.l.b16 %v2265
        %v2298 = vunpack.c.l.b16 %v2266
        %v2299 = vunpack.c.l.b16 %v2267
        %v2300 = vunpack.c.l.b16 %v2268
        %v2301 = vunpack.c.l.b16 %v2269
        %v2302 = vunpack.c.l.b16 %v2270
        %v2303 = vunpack.c.l.b16 %v2271
        %v2304 = vpack.c.b16 %v2289, %v2288
        %v2305 = vpack.c.b16 %v2291, %v2290
        %v2306 = vpack.c.b16 %v2293, %v2292
        %v2307 = vpack.c.b16 %v2295, %v2294
        %v2308 = vpack.c.b16 %v2297, %v2296
        %v2309 = vpack.c.b16 %v2299, %v2298
        %v2310 = vpack.c.b16 %v2301, %v2300
        %v2311 = vpack.c.b16 %v2303, %v2302
        %2312 = vrot.lane.b32.xlu0 %v2304, 96
        %v2313 = vpop.permute.xlu0 %2312
        %2314 = vrot.lane.b32.xlu0 %v2305, 96
        %v2315 = vpop.permute.xlu0 %2314
        %2316 = vrot.lane.b32.xlu0 %v2306, 96
        %v2317 = vpop.permute.xlu0 %2316
        %2318 = vrot.lane.b32.xlu0 %v2307, 96
        %v2319 = vpop.permute.xlu0 %2318
        %2320 = vrot.lane.b32.xlu0 %v2308, 96
        %v2321 = vpop.permute.xlu0 %2320
        %2322 = vrot.lane.b32.xlu0 %v2309, 96
        %v2323 = vpop.permute.xlu0 %2322
        %2324 = vrot.lane.b32.xlu0 %v2310, 96
        %v2325 = vpop.permute.xlu0 %2324
        %2326 = vrot.lane.b32.xlu0 %v2311, 96
        %v2327 = vpop.permute.xlu0 %2326
        %vm2336 = vcmask 917248
        %2337 = vst.msk [vmem:[#allocation3] sm:$0xff] %vm2336, %v2313
        %2338 = vst.msk [vmem:[#allocation3 + $0x10] sm:$0xff] %vm2336, %v2315
        %2339 = vst.msk [vmem:[#allocation3 + $0x20] sm:$0xff] %vm2336, %v2317
        %2340 = vst.msk [vmem:[#allocation3 + $0x30] sm:$0xff] %vm2336, %v2319
        %2341 = vst.msk [vmem:[#allocation3 + $0x40] sm:$0xff] %vm2336, %v2321
        %2342 = vst.msk [vmem:[#allocation3 + $0x50] sm:$0xff] %vm2336, %v2323
        %2343 = vst.msk [vmem:[#allocation3 + $0x60] sm:$0xff] %vm2336, %v2325
        %2344 = vst.msk [vmem:[#allocation3 + $0x70] sm:$0xff] %vm2336, %v2327
        %v2345 = vld [vmem:[%s2255] sm:$0xf]
        %v2346 = vld [vmem:[%s2255 + $0x4] sm:$0xf]
        %v2347 = vld [vmem:[%s2255 + $0x8] sm:$0x1]
        %v2348 = vld [vmem:[%s2255 + $0xc] sm:$0xf]
        %v2349 = vld [vmem:[%s2255 + $0x10] sm:$0xf]
        %v2350 = vld [vmem:[%s2255 + $0x14] sm:$0x1]
        %v2351 = vld [vmem:[%s2255 + $0x18] sm:$0xf]
        %v2352 = vld [vmem:[%s2255 + $0x1c] sm:$0xf]
        %v2353 = vld [vmem:[%s2255 + $0x20] sm:$0x1]
        %v2354 = vld [vmem:[%s2255 + $0x24] sm:$0xf]
        %v2355 = vld [vmem:[%s2255 + $0x28] sm:$0xf]
        %v2356 = vld [vmem:[%s2255 + $0x2c] sm:$0x1]
        %v2357 = vld [vmem:[%s2255 + $0x30] sm:$0xf]
        %v2358 = vld [vmem:[%s2255 + $0x34] sm:$0xf]
        %v2359 = vld [vmem:[%s2255 + $0x38] sm:$0x1]
        %v2360 = vld [vmem:[%s2255 + $0x3c] sm:$0xf]
        %v2361 = vld [vmem:[%s2255 + $0x40] sm:$0xf]
        %v2362 = vld [vmem:[%s2255 + $0x44] sm:$0x1]
        %v2363 = vld [vmem:[%s2255 + $0x48] sm:$0xf]
        %v2364 = vld [vmem:[%s2255 + $0x4c] sm:$0xf]
        %v2365 = vld [vmem:[%s2255 + $0x50] sm:$0x1]
        %v2366 = vld [vmem:[%s2255 + $0x54] sm:$0xf]
        %v2367 = vld [vmem:[%s2255 + $0x58] sm:$0xf]
        %v2368 = vld [vmem:[%s2255 + $0x5c] sm:$0x1]
        %v2370 = vshrl.u32 %v2345, 16
        %v2372 = vrot.slane %v2370, 4
        %v2373 = vshll.u32 %v2345, 16
        %v2375 = vrot.slane %v2373, 5
        %v2376 = vor.u32 %v2372, %v2375
        %v2377 = vrot.slane %v2376, 4
        %v2379 = vshll.u32 %v2346, 16
        %v2381 = vrot.slane %v2379, 5
        %v2382 = vsel %vm1317, %v2377, %v2381
        %v2383 = vshrl.u32 %v2346, 16
        %v2385 = vrot.slane %v2383, 4
        %v2386 = vor.u32 %v2385, %v2381
        %v2387 = vrot.slane %v2386, 4
        %v2389 = vshll.u32 %v2347, 16
        %v2391 = vrot.slane %v2389, 5
        %v2392 = vsel %vm1317, %v2387, %v2391
        %v2394 = vshrl.u32 %v2348, 16
        %v2396 = vrot.slane %v2394, 4
        %v2397 = vshll.u32 %v2348, 16
        %v2399 = vrot.slane %v2397, 5
        %v2400 = vor.u32 %v2396, %v2399
        %v2401 = vrot.slane %v2400, 4
        %v2403 = vshll.u32 %v2349, 16
        %v2405 = vrot.slane %v2403, 5
        %v2406 = vsel %vm1317, %v2401, %v2405
        %v2407 = vshrl.u32 %v2349, 16
        %v2409 = vrot.slane %v2407, 4
        %v2410 = vor.u32 %v2409, %v2405
        %v2411 = vrot.slane %v2410, 4
        %v2413 = vshll.u32 %v2350, 16
        %v2415 = vrot.slane %v2413, 5
        %v2416 = vsel %vm1317, %v2411, %v2415
        %v2418 = vshrl.u32 %v2351, 16
        %v2420 = vrot.slane %v2418, 4
        %v2421 = vshll.u32 %v2351, 16
        %v2423 = vrot.slane %v2421, 5
        %v2424 = vor.u32 %v2420, %v2423
        %v2425 = vrot.slane %v2424, 4
        %v2427 = vshll.u32 %v2352, 16
        %v2429 = vrot.slane %v2427, 5
        %v2430 = vsel %vm1317, %v2425, %v2429
        %v2431 = vshrl.u32 %v2352, 16
        %v2433 = vrot.slane %v2431, 4
        %v2434 = vor.u32 %v2433, %v2429
        %v2435 = vrot.slane %v2434, 4
        %v2437 = vshll.u32 %v2353, 16
        %v2439 = vrot.slane %v2437, 5
        %v2440 = vsel %vm1317, %v2435, %v2439
        %v2442 = vshrl.u32 %v2354, 16
        %v2444 = vrot.slane %v2442, 4
        %v2445 = vshll.u32 %v2354, 16
        %v2447 = vrot.slane %v2445, 5
        %v2448 = vor.u32 %v2444, %v2447
        %v2449 = vrot.slane %v2448, 4
        %v2451 = vshll.u32 %v2355, 16
        %v2453 = vrot.slane %v2451, 5
        %v2454 = vsel %vm1317, %v2449, %v2453
        %v2455 = vshrl.u32 %v2355, 16
        %v2457 = vrot.slane %v2455, 4
        %v2458 = vor.u32 %v2457, %v2453
        %v2459 = vrot.slane %v2458, 4
        %v2461 = vshll.u32 %v2356, 16
        %v2463 = vrot.slane %v2461, 5
        %v2464 = vsel %vm1317, %v2459, %v2463
        %v2466 = vshrl.u32 %v2357, 16
        %v2468 = vrot.slane %v2466, 4
        %v2469 = vshll.u32 %v2357, 16
        %v2471 = vrot.slane %v2469, 5
        %v2472 = vor.u32 %v2468, %v2471
        %v2473 = vrot.slane %v2472, 4
        %v2475 = vshll.u32 %v2358, 16
        %v2477 = vrot.slane %v2475, 5
        %v2478 = vsel %vm1317, %v2473, %v2477
        %v2479 = vshrl.u32 %v2358, 16
        %v2481 = vrot.slane %v2479, 4
        %v2482 = vor.u32 %v2481, %v2477
        %v2483 = vrot.slane %v2482, 4
        %v2485 = vshll.u32 %v2359, 16
        %v2487 = vrot.slane %v2485, 5
        %v2488 = vsel %vm1317, %v2483, %v2487
        %v2490 = vshrl.u32 %v2360, 16
        %v2492 = vrot.slane %v2490, 4
        %v2493 = vshll.u32 %v2360, 16
        %v2495 = vrot.slane %v2493, 5
        %v2496 = vor.u32 %v2492, %v2495
        %v2497 = vrot.slane %v2496, 4
        %v2499 = vshll.u32 %v2361, 16
        %v2501 = vrot.slane %v2499, 5
        %v2502 = vsel %vm1317, %v2497, %v2501
        %v2503 = vshrl.u32 %v2361, 16
        %v2505 = vrot.slane %v2503, 4
        %v2506 = vor.u32 %v2505, %v2501
        %v2507 = vrot.slane %v2506, 4
        %v2509 = vshll.u32 %v2362, 16
        %v2511 = vrot.slane %v2509, 5
        %v2512 = vsel %vm1317, %v2507, %v2511
        %v2514 = vshrl.u32 %v2363, 16
        %v2516 = vrot.slane %v2514, 4
        %v2517 = vshll.u32 %v2363, 16
        %v2519 = vrot.slane %v2517, 5
        %v2520 = vor.u32 %v2516, %v2519
        %v2521 = vrot.slane %v2520, 4
        %v2523 = vshll.u32 %v2364, 16
        %v2525 = vrot.slane %v2523, 5
        %v2526 = vsel %vm1317, %v2521, %v2525
        %v2527 = vshrl.u32 %v2364, 16
        %v2529 = vrot.slane %v2527, 4
        %v2530 = vor.u32 %v2529, %v2525
        %v2531 = vrot.slane %v2530, 4
        %v2533 = vshll.u32 %v2365, 16
        %v2535 = vrot.slane %v2533, 5
        %v2536 = vsel %vm1317, %v2531, %v2535
        %v2538 = vshrl.u32 %v2366, 16
        %v2540 = vrot.slane %v2538, 4
        %v2541 = vshll.u32 %v2366, 16
        %v2543 = vrot.slane %v2541, 5
        %v2544 = vor.u32 %v2540, %v2543
        %v2545 = vrot.slane %v2544, 4
        %v2547 = vshll.u32 %v2367, 16
        %v2549 = vrot.slane %v2547, 5
        %v2550 = vsel %vm1317, %v2545, %v2549
        %v2551 = vshrl.u32 %v2367, 16
        %v2553 = vrot.slane %v2551, 4
        %v2554 = vor.u32 %v2553, %v2549
        %v2555 = vrot.slane %v2554, 4
        %v2557 = vshll.u32 %v2368, 16
        %v2559 = vrot.slane %v2557, 5
        %v2560 = vsel %vm1317, %v2555, %v2559
        %v2561 = vunpack.c.l.b16 %v2382
        %v2562 = vunpack.c.l.b16 %v2392
        %v2563 = vunpack.c.l.b16 %v2406
        %v2564 = vunpack.c.l.b16 %v2416
        %v2565 = vunpack.c.l.b16 %v2430
        %v2566 = vunpack.c.l.b16 %v2440
        %v2567 = vunpack.c.l.b16 %v2454
        %v2568 = vunpack.c.l.b16 %v2464
        %v2569 = vunpack.c.l.b16 %v2478
        %v2570 = vunpack.c.l.b16 %v2488
        %v2571 = vunpack.c.l.b16 %v2502
        %v2572 = vunpack.c.l.b16 %v2512
        %v2573 = vunpack.c.l.b16 %v2526
        %v2574 = vunpack.c.l.b16 %v2536
        %v2575 = vunpack.c.l.b16 %v2550
        %v2576 = vunpack.c.l.b16 %v2560
        %v2577 = vpack.c.b16 %v2562, %v2561
        %v2578 = vpack.c.b16 %v2564, %v2563
        %v2579 = vpack.c.b16 %v2566, %v2565
        %v2580 = vpack.c.b16 %v2568, %v2567
        %v2581 = vpack.c.b16 %v2570, %v2569
        %v2582 = vpack.c.b16 %v2572, %v2571
        %v2583 = vpack.c.b16 %v2574, %v2573
        %v2584 = vpack.c.b16 %v2576, %v2575
        %2585 = vrot.lane.b32.xlu0 %v2577, 112
        %v2586 = vpop.permute.xlu0 %2585
        %2587 = vrot.lane.b32.xlu0 %v2578, 112
        %v2588 = vpop.permute.xlu0 %2587
        %2589 = vrot.lane.b32.xlu0 %v2579, 112
        %v2590 = vpop.permute.xlu0 %2589
        %2591 = vrot.lane.b32.xlu0 %v2580, 112
        %v2592 = vpop.permute.xlu0 %2591
        %2593 = vrot.lane.b32.xlu0 %v2581, 112
        %v2594 = vpop.permute.xlu0 %2593
        %2595 = vrot.lane.b32.xlu0 %v2582, 112
        %v2596 = vpop.permute.xlu0 %2595
        %2597 = vrot.lane.b32.xlu0 %v2583, 112
        %v2598 = vpop.permute.xlu0 %2597
        %2599 = vrot.lane.b32.xlu0 %v2584, 112
        %v2600 = vpop.permute.xlu0 %2599
        %vm2609 = vcmask 1048448
        %2610 = vst.msk [vmem:[#allocation3] sm:$0xff] %vm2609, %v2586
        %2611 = vst.msk [vmem:[#allocation3 + $0x10] sm:$0xff] %vm2609, %v2588
        %2612 = vst.msk [vmem:[#allocation3 + $0x20] sm:$0xff] %vm2609, %v2590
        %2613 = vst.msk [vmem:[#allocation3 + $0x30] sm:$0xff] %vm2609, %v2592
        %2614 = vst.msk [vmem:[#allocation3 + $0x40] sm:$0xff] %vm2609, %v2594
        %2615 = vst.msk [vmem:[#allocation3 + $0x50] sm:$0xff] %vm2609, %v2596
        %2616 = vst.msk [vmem:[#allocation3 + $0x60] sm:$0xff] %vm2609, %v2598
        %2617 = vst.msk [vmem:[#allocation3 + $0x70] sm:$0xff] %vm2609, %v2600
        %v2618 = vld [vmem:[%s2255] sm:$0xe]
        %v2619 = vld [vmem:[%s2255 + $0x4] sm:$0xf]
        %v2620 = vld [vmem:[%s2255 + $0x8] sm:$0x1]
        %v2621 = vld [vmem:[%s2255 + $0xc] sm:$0xe]
        %v2622 = vld [vmem:[%s2255 + $0x10] sm:$0xf]
        %v2623 = vld [vmem:[%s2255 + $0x14] sm:$0x1]
        %v2624 = vld [vmem:[%s2255 + $0x18] sm:$0xe]
        %v2625 = vld [vmem:[%s2255 + $0x1c] sm:$0xf]
        %v2626 = vld [vmem:[%s2255 + $0x20] sm:$0x1]
        %v2627 = vld [vmem:[%s2255 + $0x24] sm:$0xe]
        %v2628 = vld [vmem:[%s2255 + $0x28] sm:$0xf]
        %v2629 = vld [vmem:[%s2255 + $0x2c] sm:$0x1]
        %v2630 = vld [vmem:[%s2255 + $0x30] sm:$0xe]
        %v2631 = vld [vmem:[%s2255 + $0x34] sm:$0xf]
        %v2632 = vld [vmem:[%s2255 + $0x38] sm:$0x1]
        %v2633 = vld [vmem:[%s2255 + $0x3c] sm:$0xe]
        %v2634 = vld [vmem:[%s2255 + $0x40] sm:$0xf]
        %v2635 = vld [vmem:[%s2255 + $0x44] sm:$0x1]
        %v2636 = vld [vmem:[%s2255 + $0x48] sm:$0xe]
        %v2637 = vld [vmem:[%s2255 + $0x4c] sm:$0xf]
        %v2638 = vld [vmem:[%s2255 + $0x50] sm:$0x1]
        %v2639 = vld [vmem:[%s2255 + $0x54] sm:$0xe]
        %v2640 = vld [vmem:[%s2255 + $0x58] sm:$0xf]
        %v2641 = vld [vmem:[%s2255 + $0x5c] sm:$0x1]
        %v2666 = vrot.slane %v2618, 5
        %v2667 = vrot.slane %v2666, 4
        %v2668 = vrot.slane %v2619, 5
        %v2669 = vsel %vm1617, %v2667, %v2668
        %v2670 = vrot.slane %v2668, 4
        %v2671 = vrot.slane %v2620, 5
        %v2672 = vsel %vm1617, %v2670, %v2671
        %v2673 = vrot.slane %v2621, 5
        %v2674 = vrot.slane %v2673, 4
        %v2675 = vrot.slane %v2622, 5
        %v2676 = vsel %vm1617, %v2674, %v2675
        %v2677 = vrot.slane %v2675, 4
        %v2678 = vrot.slane %v2623, 5
        %v2679 = vsel %vm1617, %v2677, %v2678
        %v2680 = vrot.slane %v2624, 5
        %v2681 = vrot.slane %v2680, 4
        %v2682 = vrot.slane %v2625, 5
        %v2683 = vsel %vm1617, %v2681, %v2682
        %v2684 = vrot.slane %v2682, 4
        %v2685 = vrot.slane %v2626, 5
        %v2686 = vsel %vm1617, %v2684, %v2685
        %v2687 = vrot.slane %v2627, 5
        %v2688 = vrot.slane %v2687, 4
        %v2689 = vrot.slane %v2628, 5
        %v2690 = vsel %vm1617, %v2688, %v2689
        %v2691 = vrot.slane %v2689, 4
        %v2692 = vrot.slane %v2629, 5
        %v2693 = vsel %vm1617, %v2691, %v2692
        %v2694 = vrot.slane %v2630, 5
        %v2695 = vrot.slane %v2694, 4
        %v2696 = vrot.slane %v2631, 5
        %v2697 = vsel %vm1617, %v2695, %v2696
        %v2698 = vrot.slane %v2696, 4
        %v2699 = vrot.slane %v2632, 5
        %v2700 = vsel %vm1617, %v2698, %v2699
        %v2701 = vrot.slane %v2633, 5
        %v2702 = vrot.slane %v2701, 4
        %v2703 = vrot.slane %v2634, 5
        %v2704 = vsel %vm1617, %v2702, %v2703
        %v2705 = vrot.slane %v2703, 4
        %v2706 = vrot.slane %v2635, 5
        %v2707 = vsel %vm1617, %v2705, %v2706
        %v2708 = vrot.slane %v2636, 5
        %v2709 = vrot.slane %v2708, 4
        %v2710 = vrot.slane %v2637, 5
        %v2711 = vsel %vm1617, %v2709, %v2710
        %v2712 = vrot.slane %v2710, 4
        %v2713 = vrot.slane %v2638, 5
        %v2714 = vsel %vm1617, %v2712, %v2713
        %v2715 = vrot.slane %v2639, 5
        %v2716 = vrot.slane %v2715, 4
        %v2717 = vrot.slane %v2640, 5
        %v2718 = vsel %vm1617, %v2716, %v2717
        %v2719 = vrot.slane %v2717, 4
        %v2720 = vrot.slane %v2641, 5
        %v2721 = vsel %vm1617, %v2719, %v2720
        %v2722 = vunpack.c.l.b16 %v2669
        %v2723 = vunpack.c.l.b16 %v2672
        %v2724 = vunpack.c.l.b16 %v2676
        %v2725 = vunpack.c.l.b16 %v2679
        %v2726 = vunpack.c.l.b16 %v2683
        %v2727 = vunpack.c.l.b16 %v2686
        %v2728 = vunpack.c.l.b16 %v2690
        %v2729 = vunpack.c.l.b16 %v2693
        %v2730 = vunpack.c.l.b16 %v2697
        %v2731 = vunpack.c.l.b16 %v2700
        %v2732 = vunpack.c.l.b16 %v2704
        %v2733 = vunpack.c.l.b16 %v2707
        %v2734 = vunpack.c.l.b16 %v2711
        %v2735 = vunpack.c.l.b16 %v2714
        %v2736 = vunpack.c.l.b16 %v2718
        %v2737 = vunpack.c.l.b16 %v2721
        %v2738 = vpack.c.b16 %v2723, %v2722
        %v2739 = vpack.c.b16 %v2725, %v2724
        %v2740 = vpack.c.b16 %v2727, %v2726
        %v2741 = vpack.c.b16 %v2729, %v2728
        %v2742 = vpack.c.b16 %v2731, %v2730
        %v2743 = vpack.c.b16 %v2733, %v2732
        %v2744 = vpack.c.b16 %v2735, %v2734
        %v2745 = vpack.c.b16 %v2737, %v2736
        %2754 = vst.msk [vmem:[#allocation3 + $0x8] sm:$0xff] %vm1282, %v2738
        %2755 = vst.msk [vmem:[#allocation3 + $0x18] sm:$0xff] %vm1282, %v2739
        %2756 = vst.msk [vmem:[#allocation3 + $0x28] sm:$0xff] %vm1282, %v2740
        %2757 = vst.msk [vmem:[#allocation3 + $0x38] sm:$0xff] %vm1282, %v2741
        %2758 = vst.msk [vmem:[#allocation3 + $0x48] sm:$0xff] %vm1282, %v2742
        %2759 = vst.msk [vmem:[#allocation3 + $0x58] sm:$0xff] %vm1282, %v2743
        %2760 = vst.msk [vmem:[#allocation3 + $0x68] sm:$0xff] %vm1282, %v2744
        %2761 = vst.msk [vmem:[#allocation3 + $0x78] sm:$0xff] %vm1282, %v2745
        %v2762 = vld [vmem:[#allocation3] sm:$0xff]
        %v2763 = vld [vmem:[#allocation3 + $0x8] sm:$0xff]
        %v2764 = vld [vmem:[#allocation3 + $0x10] sm:$0xff]
        %v2765 = vld [vmem:[#allocation3 + $0x18] sm:$0xff]
        %v2766 = vld [vmem:[#allocation3 + $0x20] sm:$0xff]
        %v2767 = vld [vmem:[#allocation3 + $0x28] sm:$0xff]
        %v2768 = vld [vmem:[#allocation3 + $0x30] sm:$0xff]
        %v2769 = vld [vmem:[#allocation3 + $0x38] sm:$0xff]
        %v2770 = vld [vmem:[#allocation3 + $0x40] sm:$0xff]
        %v2771 = vld [vmem:[#allocation3 + $0x48] sm:$0xff]
        %v2772 = vld [vmem:[#allocation3 + $0x50] sm:$0xff]
        %v2773 = vld [vmem:[#allocation3 + $0x58] sm:$0xff]
        %v2774 = vld [vmem:[#allocation3 + $0x60] sm:$0xff]
        %v2775 = vld [vmem:[#allocation3 + $0x68] sm:$0xff]
        %v2776 = vld [vmem:[#allocation3 + $0x70] sm:$0xff]
        %v2777 = vld [vmem:[#allocation3 + $0x78] sm:$0xff]
        %v2778 = vld [vmem:[%s5] sm:$0xf]
        %v2779 = vld [vmem:[%s5 + $0x4] sm:$0xf]
        %v2780 = vld [vmem:[%s5 + $0x8] sm:$0xf]
        %v2781 = vld [vmem:[%s5 + $0xc] sm:$0xf]
        %v2782 = vld [vmem:[%s5 + $0x10] sm:$0xf]
        %v2783 = vld [vmem:[%s5 + $0x14] sm:$0xf]
        %v2784 = vld [vmem:[%s5 + $0x18] sm:$0xf]
        %v2785 = vld [vmem:[%s5 + $0x1c] sm:$0xf]
        %v2786 = vld [vmem:[%s5 + $0x20] sm:$0xf]
        %v2787 = vld [vmem:[%s5 + $0x24] sm:$0xf]
        %v2788 = vld [vmem:[%s5 + $0x28] sm:$0xf]
        %v2789 = vld [vmem:[%s5 + $0x2c] sm:$0xf]
        %v2790 = vld [vmem:[%s5 + $0x30] sm:$0xf]
        %v2791 = vld [vmem:[%s5 + $0x34] sm:$0xf]
        %v2792 = vld [vmem:[%s5 + $0x38] sm:$0xf]
        %v2793 = vld [vmem:[%s5 + $0x3c] sm:$0xf]
        %v2794 = vld [vmem:[%s5 + $0x40] sm:$0xf]
        %v2795 = vld [vmem:[%s5 + $0x44] sm:$0xf]
        %v2814 = vunpack.c.l.b16 %v2778
        %v2815 = vunpack.c.l.b16 %v2779
        %v2816 = vunpack.c.l.b16 %v2780
        %v2817 = vunpack.c.l.b16 %v2781
        %v2818 = vunpack.c.l.b16 %v2782
        %v2819 = vunpack.c.l.b16 %v2783
        %v2820 = vunpack.c.l.b16 %v2784
        %v2821 = vunpack.c.l.b16 %v2785
        %v2822 = vunpack.c.l.b16 %v2786
        %v2823 = vunpack.c.l.b16 %v2787
        %v2824 = vunpack.c.l.b16 %v2788
        %v2825 = vunpack.c.l.b16 %v2789
        %v2826 = vunpack.c.l.b16 %v2790
        %v2827 = vunpack.c.l.b16 %v2791
        %v2828 = vunpack.c.l.b16 %v2792
        %v2829 = vunpack.c.l.b16 %v2793
        %v2830 = vunpack.c.l.b16 %v2794
        %v2831 = vunpack.c.l.b16 %v2795
        %v2832 = vpack.c.b16 %v2815, %v2814
        %v2833 = vpack.c.b16 %v2817, %v2816
        %v2834 = vpack.c.b16 %v2819, %v2818
        %v2835 = vpack.c.b16 %v2821, %v2820
        %v2836 = vpack.c.b16 %v2823, %v2822
        %v2837 = vpack.c.b16 %v2825, %v2824
        %v2838 = vpack.c.b16 %v2827, %v2826
        %v2839 = vpack.c.b16 %v2829, %v2828
        %v2840 = vpack.c.b16 %v2831, %v2830
        %v2851 = vsel %vm1282, %v2763, 0
        %v2854 = vsel %vm1282, %v2765, 0
        %v2857 = vsel %vm1282, %v2767, 0
        %v2860 = vsel %vm1282, %v2769, 0
        %v2863 = vsel %vm1282, %v2771, 0
        %v2866 = vsel %vm1282, %v2773, 0
        %v2869 = vsel %vm1282, %v2775, 0
        %v2872 = vsel %vm1282, %v2777, 0
        %2874 = vmatprep.subr.bf16.mxu0 0
        %2875 = vmatpush1.bf16.msra.mxu0 %v2832
        %2876 = vmatprep.subr.bf16.mxu0 0
        %2877 = vmatpush1.bf16.msra.mxu0 %v2833
        %2878 = vmatprep.subr.bf16.mxu0 0
        %2879 = vmatpush1.bf16.msra.mxu0 %v2834
        %2880 = vmatprep.subr.bf16.mxu0 0
        %2881 = vmatpush1.bf16.msra.mxu0 %v2835
        %2882 = vmatprep.subr.bf16.mxu0 0
        %2883 = vmatpush1.bf16.msra.mxu0 %v2836
        %2884 = vmatprep.subr.bf16.mxu0 0
        %2885 = vmatpush1.bf16.msra.mxu0 %v2837
        %2886 = vmatprep.subr.bf16.mxu0 0
        %2887 = vmatpush1.bf16.msra.mxu0 %v2838
        %2888 = vmatprep.subr.bf16.mxu0 0
        %2889 = vmatpush1.bf16.msra.mxu0 %v2839
        %2890 = vmatprep.subr.bf16.mxu0 0
        %2891 = vmatpush1.bf16.msra.mxu0 %v2840
        %2892 = vmatprep.subr.bf16.mxu0 0
        %2893 = vmatpush1.bf16.msra.mxu0 0
        %2894 = vmatprep.subr.bf16.mxu0 0
        %2895 = vmatpush1.bf16.msra.mxu0 0
        %2896 = vmatprep.subr.bf16.mxu0 0
        %2897 = vmatpush1.bf16.msra.mxu0 0
        %2898 = vmatprep.subr.bf16.mxu0 0
        %2899 = vmatpush1.bf16.msra.mxu0 0
        %2900 = vmatprep.subr.bf16.mxu0 0
        %2901 = vmatpush1.bf16.msra.mxu0 0
        %2902 = vmatprep.subr.bf16.mxu0 0
        %2903 = vmatpush1.bf16.msra.mxu0 0
        %2904 = vmatprep.subr.bf16.mxu0 0
        %2905 = vmatpush1.bf16.msra.mxu0 0
        %2906 = vmatprep.mubr.bf16.mxu0 %v2851
        %2907 = vmatmul.mubr.bf16.gmra.mrb[0].mxu0 %v2762
        %v2908 = vpop.f32.mrb[0].mxu0
        %v2909 = vadd.f32 0.0, %v2908
        %v2910 = vpop.f32.mrb[0].mxu0
        %v2911 = vpop.f32.mrb[0].mxu0
        %v2912 = vadd.f32 0.0, %v2911
        %v2913 = vpop.f32.mrb[0].mxu0
        %2914 = vmatprep.mubr.bf16.mxu0 %v2854
        %2915 = vmatmul.mubr.bf16.gmra.mrb[0].mxu0 %v2764
        %v2916 = vpop.f32.mrb[0].mxu0
        %v2917 = vadd.f32 0.0, %v2916
        %v2918 = vpop.f32.mrb[0].mxu0
        %v2919 = vpop.f32.mrb[0].mxu0
        %v2920 = vadd.f32 0.0, %v2919
        %v2921 = vpop.f32.mrb[0].mxu0
        %2922 = vmatprep.mubr.bf16.mxu0 %v2857
        %2923 = vmatmul.mubr.bf16.gmra.mrb[0].mxu0 %v2766
        %v2924 = vpop.f32.mrb[0].mxu0
        %v2925 = vadd.f32 0.0, %v2924
        %v2926 = vpop.f32.mrb[0].mxu0
        %v2927 = vpop.f32.mrb[0].mxu0
        %v2928 = vadd.f32 0.0, %v2927
        %v2929 = vpop.f32.mrb[0].mxu0
        %2930 = vmatprep.mubr.bf16.mxu0 %v2860
        %2931 = vmatmul.mubr.bf16.gmra.mrb[0].mxu0 %v2768
        %v2932 = vpop.f32.mrb[0].mxu0
        %v2933 = vadd.f32 0.0, %v2932
        %v2934 = vpop.f32.mrb[0].mxu0
        %v2935 = vpop.f32.mrb[0].mxu0
        %v2936 = vadd.f32 0.0, %v2935
        %v2937 = vpop.f32.mrb[0].mxu0
        %2938 = vmatprep.mubr.bf16.mxu0 %v2863
        %2939 = vmatmul.mubr.bf16.gmra.mrb[0].mxu0 %v2770
        %v2940 = vpop.f32.mrb[0].mxu0
        %v2941 = vadd.f32 0.0, %v2940
        %v2942 = vpop.f32.mrb[0].mxu0
        %v2943 = vpop.f32.mrb[0].mxu0
        %v2944 = vadd.f32 0.0, %v2943
        %v2945 = vpop.f32.mrb[0].mxu0
        %2946 = vmatprep.mubr.bf16.mxu0 %v2866
        %2947 = vmatmul.mubr.bf16.gmra.mrb[0].mxu0 %v2772
        %v2948 = vpop.f32.mrb[0].mxu0
        %v2949 = vadd.f32 0.0, %v2948
        %v2950 = vpop.f32.mrb[0].mxu0
        %v2951 = vpop.f32.mrb[0].mxu0
        %v2952 = vadd.f32 0.0, %v2951
        %v2953 = vpop.f32.mrb[0].mxu0
        %2954 = vmatprep.mubr.bf16.mxu0 %v2869
        %2955 = vmatmul.mubr.bf16.gmra.mrb[0].mxu0 %v2774
        %v2956 = vpop.f32.mrb[0].mxu0
        %v2957 = vadd.f32 0.0, %v2956
        %v2958 = vpop.f32.mrb[0].mxu0
        %v2959 = vpop.f32.mrb[0].mxu0
        %v2960 = vadd.f32 0.0, %v2959
        %v2961 = vpop.f32.mrb[0].mxu0
        %2962 = vmatprep.mubr.bf16.mxu0 %v2872
        %2963 = vmatmul.mubr.bf16.gmra.mrb[0].mxu0 %v2776
        %v2964 = vpop.f32.mrb[0].mxu0
        %v2965 = vadd.f32 0.0, %v2964
        %v2966 = vpop.f32.mrb[0].mxu0
        %v2967 = vpop.f32.mrb[0].mxu0
        %v2968 = vadd.f32 0.0, %v2967
        %v2969 = vpop.f32.mrb[0].mxu0
        %2970 = vdwg.mxu0
        %v2971 = vld [vmem:[%s6] sm:$0x1]
        %v2973 = vlaneseq
        %v2974 = vshrl.u32 %v2973, 7
        %v2975 = vsub.s32 0, %v2974
        %v2976 = vrot.slane %v2971, %v2975
        %v2978 = vmul.f32 %v2909, %v2976
        %v2979 = vmul.f32 %v2912, %v2976
        %v2980 = vmul.f32 %v2917, %v2976
        %v2981 = vmul.f32 %v2920, %v2976
        %v2982 = vmul.f32 %v2925, %v2976
        %v2983 = vmul.f32 %v2928, %v2976
        %v2984 = vmul.f32 %v2933, %v2976
        %v2985 = vmul.f32 %v2936, %v2976
        %v2986 = vmul.f32 %v2941, %v2976
        %v2987 = vmul.f32 %v2944, %v2976
        %v2988 = vmul.f32 %v2949, %v2976
        %v2989 = vmul.f32 %v2952, %v2976
        %v2990 = vmul.f32 %v2957, %v2976
        %v2991 = vmul.f32 %v2960, %v2976
        %v2992 = vmul.f32 %v2965, %v2976
        %v2993 = vmul.f32 %v2968, %v2976
        %v2994 = vld [vmem:[%s7] sm:$0x1]
        %v2996 = vlaneseq
        %v2997 = vshrl.u32 %v2996, 7
        %v2998 = vsub.s32 0, %v2997
        %v2999 = vrot.slane %v2994, %v2998
        %v3001 = vadd.f32 %v2978, %v2999
        %v3002 = vadd.f32 %v2979, %v2999
        %v3003 = vadd.f32 %v2980, %v2999
        %v3004 = vadd.f32 %v2981, %v2999
        %v3005 = vadd.f32 %v2982, %v2999
        %v3006 = vadd.f32 %v2983, %v2999
        %v3007 = vadd.f32 %v2984, %v2999
        %v3008 = vadd.f32 %v2985, %v2999
        %v3009 = vadd.f32 %v2986, %v2999
        %v3010 = vadd.f32 %v2987, %v2999
        %v3011 = vadd.f32 %v2988, %v2999
        %v3012 = vadd.f32 %v2989, %v2999
        %v3013 = vadd.f32 %v2990, %v2999
        %v3014 = vadd.f32 %v2991, %v2999
        %v3015 = vadd.f32 %v2992, %v2999
        %v3016 = vadd.f32 %v2993, %v2999
        %v3017 = vmax.f32 %v3001, 0.0
        %v3018 = vmax.f32 %v3002, 0.0
        %v3019 = vmax.f32 %v3003, 0.0
        %v3020 = vmax.f32 %v3004, 0.0
        %v3021 = vmax.f32 %v3005, 0.0
        %v3022 = vmax.f32 %v3006, 0.0
        %v3023 = vmax.f32 %v3007, 0.0
        %v3024 = vmax.f32 %v3008, 0.0
        %v3025 = vmax.f32 %v3009, 0.0
        %v3026 = vmax.f32 %v3010, 0.0
        %v3027 = vmax.f32 %v3011, 0.0
        %v3028 = vmax.f32 %v3012, 0.0
        %v3029 = vmax.f32 %v3013, 0.0
        %v3030 = vmax.f32 %v3014, 0.0
        %v3031 = vmax.f32 %v3015, 0.0
        %v3032 = vmax.f32 %v3016, 0.0
        %v3033 = vpack.c.bf16 %v3018, %v3017
        %v3034 = vpack.c.bf16 %v3020, %v3019
        %v3035 = vpack.c.bf16 %v3022, %v3021
        %v3036 = vpack.c.bf16 %v3024, %v3023
        %v3037 = vpack.c.bf16 %v3026, %v3025
        %v3038 = vpack.c.bf16 %v3028, %v3027
        %v3039 = vpack.c.bf16 %v3030, %v3029
        %v3040 = vpack.c.bf16 %v3032, %v3031
        %v3049 = vunpack.c.l.b16 %v3033
        %v3050 = vunpack.c.h.b16 %v3033
        %v3051 = vunpack.c.l.b16 %v3034
        %v3052 = vunpack.c.h.b16 %v3034
        %v3053 = vunpack.c.l.b16 %v3035
        %v3054 = vunpack.c.h.b16 %v3035
        %v3055 = vunpack.c.l.b16 %v3036
        %v3056 = vunpack.c.h.b16 %v3036
        %v3057 = vunpack.c.l.b16 %v3037
        %v3058 = vunpack.c.h.b16 %v3037
        %v3059 = vunpack.c.l.b16 %v3038
        %v3060 = vunpack.c.h.b16 %v3038
        %v3061 = vunpack.c.l.b16 %v3039
        %v3062 = vunpack.c.h.b16 %v3039
        %v3063 = vunpack.c.l.b16 %v3040
        %v3064 = vunpack.c.h.b16 %v3040
        %v3065 = vpack.c.b16 %v3049, %v3049
        %v3066 = vpack.c.b16 %v3050, %v3050
        %v3067 = vpack.c.b16 %v3051, %v3051
        %v3068 = vpack.c.b16 %v3052, %v3052
        %v3069 = vpack.c.b16 %v3053, %v3053
        %v3070 = vpack.c.b16 %v3054, %v3054
        %v3071 = vpack.c.b16 %v3055, %v3055
        %v3072 = vpack.c.b16 %v3056, %v3056
        %v3073 = vpack.c.b16 %v3057, %v3057
        %v3074 = vpack.c.b16 %v3058, %v3058
        %v3075 = vpack.c.b16 %v3059, %v3059
        %v3076 = vpack.c.b16 %v3060, %v3060
        %v3077 = vpack.c.b16 %v3061, %v3061
        %v3078 = vpack.c.b16 %v3062, %v3062
        %v3079 = vpack.c.b16 %v3063, %v3063
        %v3080 = vpack.c.b16 %v3064, %v3064
        %3097 = vst [vmem:[%s378] sm:$0xf] %v3065
        %3098 = vst [vmem:[%s378 + $0x4] sm:$0xf] %v3066
        %3099 = vst [vmem:[%s378 + $0x8] sm:$0xf] %v3067
        %3100 = vst [vmem:[%s378 + $0xc] sm:$0xf] %v3068
        %3101 = vst [vmem:[%s378 + $0x10] sm:$0xf] %v3069
        %3102 = vst [vmem:[%s378 + $0x14] sm:$0xf] %v3070
        %3103 = vst [vmem:[%s378 + $0x18] sm:$0xf] %v3071
        %3104 = vst [vmem:[%s378 + $0x1c] sm:$0xf] %v3072
        %3105 = vst [vmem:[%s378 + $0x20] sm:$0xf] %v3073
        %3106 = vst [vmem:[%s378 + $0x24] sm:$0xf] %v3074
        %3107 = vst [vmem:[%s378 + $0x28] sm:$0xf] %v3075
        %3108 = vst [vmem:[%s378 + $0x2c] sm:$0xf] %v3076
        %3109 = vst [vmem:[%s378 + $0x30] sm:$0xf] %v3077
        %3110 = vst [vmem:[%s378 + $0x34] sm:$0xf] %v3078
        %3111 = vst [vmem:[%s378 + $0x38] sm:$0xf] %v3079
        %3112 = vst [vmem:[%s378 + $0x3c] sm:$0xf] %v3080
        %s3113 = sand.u32 %s230, 1
        %s3114 = scalar_lea.sflag [#allocation5], %s3113
        %s3115 = sand.u32 %s230, 1
        %s3116 = smul.addr %s3115, 64
        %s3117 = scalar_lea.vmem [#allocation4], %s3116
        // Predicated region
        $region53: #{fire_forward.1} parent=51 // pred_check
          %p3118 = pneg %p240
        $region54: #{fire_forward.1} parent=51 // pred_check_branch
          %3120 = sbr.rel (%p3118) target = $region56
        $region55: #{fire_forward.1} parent=51 // pred_region
          %s3121 = smul.u32 8, %s27
          %s3123 = ssub.s32 1024, 1024
          %3124 = vsyncadd %s3114, %s3123
          %s3125 = smul.addr %s3121, 2
          %s3126 = smul.addr %s26, 16
          %s3127 = sadd.s32 %s3125, %s3126
          %s3128 = smul.addr %s3127, 64
          %s3129 = scalar_lea.hbm %s8, %s3128
          %s3130 = sshll.u32 %s3117, 4
          %s3131 = int_to_ptr.vmem [resolvable:$true] %s3130
          %3136 = dma.vmem_to_hbm [thread:$0]  %s3131, 1024, %s3129, %s3114, 64, 64, 4
        $region56: #{fire_forward.1} parent=51 // pred_fallthru
          _
      $region52: #{fire_forward.1} parent=5 // pred_fallthru
        _
      %p3137 = scmp.le.s32.totalorder 2, %s17
      // Predicated region
      $region57: #{fire_forward.1} parent=5 // pred_check
        %p3138 = pneg %p3137
      $region58: #{fire_forward.1} parent=5 // pred_check_branch
        %3140 = sbr.rel (%p3138) target = $region60
      $region59: #{fire_forward.1} parent=5 // pred_region
        %s3141 = ssub.s32 %s17, 2
        // Predicated region
        $region61: #{fire_forward.1} parent=59 // pred_check
          %p3142 = pneg %p246
        $region62: #{fire_forward.1} parent=59 // pred_check_branch
          %3144 = sbr.rel (%p3142) target = $region64
        $region63: #{fire_forward.1} parent=59 // pred_region
          %s3145 = sand.u32 %s231, 1
          %s3146 = scalar_lea.sflag [#allocation5], %s3145
          %s3147 = sand.u32 %s231, 1
          %s3148 = smul.addr %s3147, 64
          %s3149 = scalar_lea.vmem [#allocation4], %s3148
          %3150 = dma.done %s3146, 1024
        $region64: #{fire_forward.1} parent=59 // pred_fallthru
          _
      $region60: #{fire_forward.1} parent=5 // pred_fallthru
        _
    $region6: #{fire_forward.1} parent=1 // loop_footer
      %s21 = sadd.s32 1, %s17
    $region7: #{fire_forward.1} parent=1 // loop_footer_branch
      %16 = sbr.rel target = $region3
    $region8: #{fire_forward.1} parent=1 // loop_exit
      _
    %3151 = vsyncpa [#allocation5], 1
    %s3152 = scalar_lea.sflag [#allocation5], 1
    %3153 = vsyncpa %s3152, 1

</llo_original>
